<compile_context>
chip_gen: v7x
topology: tpu7x:2x2x1
jax: 0.10.0
libtpu: 0.0.40
codegen_flags: <defaults>
</compile_context>

<pallas_src>
import functools
import math

import jax
import jax.numpy as jnp
from jax.experimental import pallas as pl
from jax.experimental.pallas import tpu as pltpu  # noqa: F401  (kept for TPU tuning hooks)


def _recip(x):
    # EUP approximate reciprocal (separate issue slot -> ~free) + one Newton step so the
    # strict f32 self-check still holds.
    r = pl.reciprocal(x, approx=True)
    return r * (2.0 - x * r)


def encoder_layer_kernel(x_ref, kv_ref, wqkv_ref, wo_ref, w1_ref, w2_ref, vec_ref,
                         out_ref, *, batch, seq, num_heads, compute_dtype):
    B, S, H = batch, seq, num_heads
    N, D = x_ref.shape                 # N = B * S, activations travel flat (lane-dense rows)
    dh = D // H
    DFF = w1_ref.shape[1]
    cdt = compute_dtype
    scale = 1.0 / math.sqrt(dh)

    x = x_ref[...]                     # (N, D) f32

    # Packed small vectors: one (8, VW) f32 VMEM tile, static lane slices.
    a1 = vec_ref[0:1, 0:D]
    b1 = vec_ref[1:2, 0:D]
    a2 = vec_ref[2:3, 0:D]
    b2 = vec_ref[3:4, 0:D]
    bo = vec_ref[4:5, 0:D]
    bf2 = vec_ref[5:6, 0:D]
    bqkv = vec_ref[6:7, 0:3 * D]
    bf1 = vec_ref[7:8, 0:DFF]

    def layer_norm(v, a, b):
        # torch semantics: a * (v - mean) / (std_unbiased + 1e-6) + b   (all f32)
        mean = jnp.mean(v, axis=-1, keepdims=True)
        c = v - mean
        var = jnp.sum(c * c, axis=-1, keepdims=True) * (1.0 / (D - 1))
        inv = _recip(jnp.sqrt(var) + 1e-6)
        return a * c * inv + b

    # ---------------- sublayer 0: x + SelfAttn(LN(x)) ----------------
    xn = layer_norm(x, a1, b1)                                          # (N, D) f32

    # Fused QKV projection: single lane-dense (N, D) @ (D, 3D) MXU pass, fused bias add.
    qkv = jnp.dot(xn.astype(cdt), wqkv_ref[...],
                  preferred_element_type=jnp.float32) + bqkv            # (N, 3D) f32

    # Head-major batched views (n = h*B + b) built from static lane slices + leading-axis
    # concat only (no transposes / lane-splitting reshapes).
    def heads(base):                                                    # -> (H*B, S, dh)
        blocks = [qkv[:, base + h * dh: base + (h + 1) * dh].reshape(B, S, dh)
                  for h in range(H)]
        return jnp.concatenate(blocks, axis=0)

    q = heads(0)
    k = heads(D)
    v = heads(2 * D)

    # Scores (single batched MXU call) + additive padding bias built in-kernel from the
    # (B, S) key-validity row (no dense (B,S,S) mask DMA).
    s = jnp.einsum('nqd,nkd->nqk', q.astype(cdt), k.astype(cdt),
                   preferred_element_type=jnp.float32) * scale          # (H*B, S, S) f32
    bias = jnp.where(kv_ref[...] == 0.0, -1e9, 0.0)                     # (B, S)
    bias = jnp.broadcast_to(bias[None], (H, B, S)).reshape(H * B, S)
    s = s + bias[:, None, :]

    # softmax in f32: EUP exp + approx reciprocal (no divide).
    m = jnp.max(s, axis=-1, keepdims=True)
    e = jnp.exp(s - m)
    p = e * _recip(jnp.sum(e, axis=-1, keepdims=True))

    o = jnp.einsum('nqk,nkd->nqd', p.astype(cdt), v.astype(cdt),
                   preferred_element_type=jnp.float32)                  # (H*B, S, dh)

    # Heads back onto lanes -> (N, D), then ONE full-depth (N,D)@(D,D) output projection.
    o_flat = jnp.concatenate([o[h * B:(h + 1) * B] for h in range(H)],
                             axis=-1).reshape(N, D)
    attn = jnp.dot(o_flat.astype(cdt), wo_ref[...],
                   preferred_element_type=jnp.float32) + bo             # (N, D)

    y = x + attn                                   # dropout == identity (eval mode)

    # ---------------- sublayer 1: y + FFN(LN(y)) ----------------
    yn = layer_norm(y, a2, b2)
    h1 = jnp.maximum(jnp.dot(yn.astype(cdt), w1_ref[...],
                             preferred_element_type=jnp.float32) + bf1, 0.0)
    ff = jnp.dot(h1.astype(cdt), w2_ref[...],
                 preferred_element_type=jnp.float32) + bf2

    out_ref[...] = y + ff                          # flat (N, D) store


def encoder_layer(x, key_valid, params, num_heads, compute_dtype=jnp.bfloat16):
    """x: (B,S,D) f32; key_valid: (B,S), 1 = attend to that key, 0 = padding.
    params is the 16-tuple (a1,b1, wq,bq, wk,bk, wv,bv, wo,bo, a2,b2, w1,bf1, w2,bf2)
    in nn.Linear (in,out) layout.  compute_dtype controls MXU operand precision only
    (accumulation, LN, softmax and residuals stay f32)."""
    (a1, b1, wq, bq, wk, bk, wv, bv, wo, bo, a2, b2, w1, bf1, w2, bf2) = params
    B, S, D = x.shape
    DFF = w1.shape[1]
    N = B * S
    cdt = compute_dtype

    # Fused QKV weight (D, 3D) and bias (1, 3D).  Weights cast once here (halves weight DMA
    # for bf16).  TODO(synk): on v7x consider fp8 for the FFN weights (W1/W2).
    wqkv = jnp.concatenate([wq, wk, wv], axis=1).astype(cdt)
    b_qkv = jnp.concatenate(
        [bq.reshape(1, D), bk.reshape(1, D), bv.reshape(1, D)], axis=1)

    # All small vectors packed into one lane-aligned (8, VW) f32 tile (single DMA);
    # VW scales with D/DFF so the packing stays valid beyond the toy shapes.
    VW = ((max(3 * D, DFF, D) + 127) // 128) * 128

    def row(v):
        v = v.reshape(-1).astype(jnp.float32)
        return jnp.pad(v, (0, VW - v.shape[0]))

    vecs = jnp.stack([row(a1), row(b1), row(a2), row(b2),
                      row(bo), row(bf2), row(b_qkv), row(bf1)])         # (8, VW)

    kernel = functools.partial(encoder_layer_kernel, batch=B, seq=S,
                               num_heads=num_heads, compute_dtype=cdt)

    # Whole layer in a single grid-less invocation: the working set is tiny, so any tiling
    # would be dominated by per-step pipeline overhead.
    # TODO(synk): for realistic S, tile the attention flash-style over a
    # (batch*head parallel, q-block parallel, kv-block arbitrary) grid with online-softmax
    # scratch (mandatory on v7x's 64 MiB VMEM), set dimension_semantics for megacore and
    # raise vmem_limit_bytes explicitly.
    out_flat = pl.pallas_call(
        kernel,
        out_shape=jax.ShapeDtypeStruct((N, D), jnp.float32),
    )(x.reshape(N, D).astype(jnp.float32),
      key_valid.astype(jnp.float32),
      wqkv,
      wo.astype(cdt),
      w1.astype(cdt),
      w2.astype(cdt),
      vecs)
    return out_flat.reshape(B, S, D)


def reference_encoder_layer(x, mask, params, num_heads):
    (a1, b1, wq, bq, wk, bk, wv, bv, wo, bo, a2, b2, w1, bf1, w2, bf2) = params
    B, S, D = x.shape
    dh = D // num_heads

    def ln(v, a, b):
        mean = jnp.mean(v, axis=-1, keepdims=True)
        var = jnp.sum((v - mean) ** 2, axis=-1, keepdims=True) / (D - 1)
        return a[0] * (v - mean) / (jnp.sqrt(var) + 1e-6) + b[0]

    xn = ln(x, a1, b1)
    q = xn @ wq + bq[0]
    k = xn @ wk + bk[0]
    v = xn @ wv + bv[0]
    q = q.reshape(B, S, num_heads, dh).transpose(0, 2, 1, 3)
    k = k.reshape(B, S, num_heads, dh).transpose(0, 2, 1, 3)
    v = v.reshape(B, S, num_heads, dh).transpose(0, 2, 1, 3)
    s = jnp.einsum("bhqd,bhkd->bhqk", q, k) / math.sqrt(dh)
    s = jnp.where(mask[:, None, :, :] == 0, -1e9, s)
    p = jax.nn.softmax(s, axis=-1)
    o = jnp.einsum("bhqk,bhkd->bhqd", p, v).transpose(0, 2, 1, 3).reshape(B, S, D)
    att_res = x + (o @ wo + bo[0])
    yn = ln(att_res, a2, b2)
    ff = jnp.maximum(yn @ w1 + bf1[0], 0.0) @ w2 + bf2[0]
    return att_res + ff


if __name__ == "__main__":
    B, S, D, H, DFF = 2, 8, 32, 4, 64

    key = jax.random.PRNGKey(0)
    keys = jax.random.split(key, 16)

    def w(k, shape, scale=0.1):
        return (scale * jax.random.normal(k, shape)).astype(jnp.float32)

    # Parameters (deterministic init). Biases/gains kept 2D (1, dim).
    a1 = jnp.ones((1, D), jnp.float32)
    b1 = jnp.zeros((1, D), jnp.float32)
    wq, bq = w(keys[0], (D, D)), w(keys[1], (1, D))
    wk, bk = w(keys[2], (D, D)), w(keys[3], (1, D))
    wv, bv = w(keys[4], (D, D)), w(keys[5], (1, D))
    wo, bo = w(keys[6], (D, D)), w(keys[7], (1, D))
    a2 = jnp.ones((1, D), jnp.float32)
    b2 = jnp.zeros((1, D), jnp.float32)
    w1, bf1 = w(keys[8], (D, DFF)), w(keys[9], (1, DFF))
    w2, bf2 = w(keys[10], (DFF, D)), w(keys[11], (1, D))

    params = (a1, b1, wq, bq, wk, bk, wv, bv, wo, bo, a2, b2, w1, bf1, w2, bf2)

    # Inputs
    x = jax.random.normal(keys[12], (B, S, D)).astype(jnp.float32)
    # Padding-style mask: batch 0 attends to all 8 keys, batch 1 only to first 6.
    lengths = jnp.array([8, 6], jnp.int32)
    key_valid = (jnp.arange(S)[None, :] < lengths[:, None]).astype(jnp.float32)   # (B, S)
    mask = jnp.broadcast_to(key_valid[:, None, :], (B, S, S)).astype(jnp.float32)  # ref only

    ref = reference_encoder_layer(x, mask, params, H)

    # Strict math check: f32 operand path must match the f32 reference tightly.
    out_f32 = jax.block_until_ready(
        encoder_layer(x, key_valid, params, H, compute_dtype=jnp.float32))
    assert out_f32.shape == (B, S, D)
    assert jnp.allclose(out_f32, ref, atol=1e-4, rtol=1e-4), "f32 path mismatch vs reference"

    # Performance path: bf16 MXU operands (f32 accumulation) — looser tolerance as flagged
    # in the review.
    out_bf16 = jax.block_until_ready(
        encoder_layer(x, key_valid, params, H, compute_dtype=jnp.bfloat16))
    assert out_bf16.shape == (B, S, D)
    assert jnp.allclose(out_bf16, ref, atol=5e-2, rtol=5e-2), "bf16 path mismatch vs reference"

    print("KERNEL_OK")
</pallas_src>

<mosaic_0001>
module attributes {stable_mosaic.version = 11 : i64} {
  func.func @encoder_layer_kernel(%arg0: memref<16x32xf32, #tpu.memory_space<vmem>>, %arg1: memref<2x8xf32, #tpu.memory_space<vmem>>, %arg2: memref<32x96xf32, #tpu.memory_space<vmem>>, %arg3: memref<32x32xf32, #tpu.memory_space<vmem>>, %arg4: memref<32x64xf32, #tpu.memory_space<vmem>>, %arg5: memref<64x32xf32, #tpu.memory_space<vmem>>, %arg6: memref<8x128xf32, #tpu.memory_space<vmem>>, %arg7: memref<16x32xf32, #tpu.memory_space<vmem>>) attributes {dimension_semantics = [], scalar_prefetch = 0 : i64, scratch_operands = 0 : i64, tpu.core_type = #tpu.core_type<tc>} {
    %c0 = arith.constant 0 : index
    %c0_0 = arith.constant 0 : index
    %0 = vector.load %arg0[%c0, %c0_0] : memref<16x32xf32, #tpu.memory_space<vmem>>, vector<16x32xf32>
    %c0_1 = arith.constant 0 : index
    %c0_2 = arith.constant 0 : index
    %1 = vector.load %arg6[%c0_1, %c0_2] : memref<8x128xf32, #tpu.memory_space<vmem>>, vector<1x32xf32>
    %c1 = arith.constant 1 : index
    %c0_3 = arith.constant 0 : index
    %2 = vector.load %arg6[%c1, %c0_3] : memref<8x128xf32, #tpu.memory_space<vmem>>, vector<1x32xf32>
    %c2 = arith.constant 2 : index
    %c0_4 = arith.constant 0 : index
    %3 = vector.load %arg6[%c2, %c0_4] : memref<8x128xf32, #tpu.memory_space<vmem>>, vector<1x32xf32>
    %c3 = arith.constant 3 : index
    %c0_5 = arith.constant 0 : index
    %4 = vector.load %arg6[%c3, %c0_5] : memref<8x128xf32, #tpu.memory_space<vmem>>, vector<1x32xf32>
    %c4 = arith.constant 4 : index
    %c0_6 = arith.constant 0 : index
    %5 = vector.load %arg6[%c4, %c0_6] : memref<8x128xf32, #tpu.memory_space<vmem>>, vector<1x32xf32>
    %c5 = arith.constant 5 : index
    %c0_7 = arith.constant 0 : index
    %6 = vector.load %arg6[%c5, %c0_7] : memref<8x128xf32, #tpu.memory_space<vmem>>, vector<1x32xf32>
    %c6 = arith.constant 6 : index
    %c0_8 = arith.constant 0 : index
    %7 = vector.load %arg6[%c6, %c0_8] : memref<8x128xf32, #tpu.memory_space<vmem>>, vector<1x96xf32>
    %c7 = arith.constant 7 : index
    %c0_9 = arith.constant 0 : index
    %8 = vector.load %arg6[%c7, %c0_9] : memref<8x128xf32, #tpu.memory_space<vmem>>, vector<1x64xf32>
    %cst = arith.constant dense<0.000000e+00> : vector<16xf32>
    %9 = vector.multi_reduction <add>, %0, %cst [1] : vector<16x32xf32> to vector<16xf32>
    %10 = vector.shape_cast %9 : vector<16xf32> to vector<16x1xf32>
    %cst_10 = arith.constant 3.200000e+01 : f32
    %11 = vector.broadcast %cst_10 : f32 to vector<16x1xf32>
    %12 = arith.divf %10, %11 : vector<16x1xf32>
    %13 = vector.broadcast %12 : vector<16x1xf32> to vector<16x32xf32>
    %14 = arith.subf %0, %13 : vector<16x32xf32>
    %15 = arith.mulf %14, %14 : vector<16x32xf32>
    %cst_11 = arith.constant dense<0.000000e+00> : vector<16xf32>
    %16 = vector.multi_reduction <add>, %15, %cst_11 [1] : vector<16x32xf32> to vector<16xf32>
    %17 = vector.shape_cast %16 : vector<16xf32> to vector<16x1xf32>
    %cst_12 = arith.constant 0.0322580636 : f32
    %18 = vector.broadcast %cst_12 : f32 to vector<16x1xf32>
    %19 = arith.mulf %17, %18 : vector<16x1xf32>
    %20 = math.sqrt %19 : vector<16x1xf32>
    %cst_13 = arith.constant 9.99999997E-7 : f32
    %21 = vector.broadcast %cst_13 : f32 to vector<16x1xf32>
    %22 = arith.addf %20, %21 : vector<16x1xf32>
    %23 = tpu.reciprocal %22 {approx = true} : vector<16x1xf32> -> vector<16x1xf32>
    %24 = arith.mulf %22, %23 : vector<16x1xf32>
    %cst_14 = arith.constant 2.000000e+00 : f32
    %25 = vector.broadcast %cst_14 : f32 to vector<16x1xf32>
    %26 = arith.subf %25, %24 : vector<16x1xf32>
    %27 = arith.mulf %23, %26 : vector<16x1xf32>
    %28 = vector.broadcast %1 : vector<1x32xf32> to vector<16x32xf32>
    %29 = arith.mulf %28, %14 : vector<16x32xf32>
    %30 = vector.broadcast %27 : vector<16x1xf32> to vector<16x32xf32>
    %31 = arith.mulf %29, %30 : vector<16x32xf32>
    %32 = vector.broadcast %2 : vector<1x32xf32> to vector<16x32xf32>
    %33 = arith.addf %31, %32 : vector<16x32xf32>
    %c0_15 = arith.constant 0 : index
    %c0_16 = arith.constant 0 : index
    %34 = vector.load %arg2[%c0_15, %c0_16] : memref<32x96xf32, #tpu.memory_space<vmem>>, vector<32x96xf32>
    %cst_17 = arith.constant dense<0.000000e+00> : vector<16x96xf32>
    %35 = tpu.matmul %33, %34, %cst_17 {dimension_numbers = #tpu.dot_dimension_numbers<[1], [0], [0], [1], [0, 0, 1, 1], [], []>} : vector<16x32xf32>, vector<32x96xf32>, vector<16x96xf32> -> vector<16x96xf32>
    %36 = vector.broadcast %7 : vector<1x96xf32> to vector<16x96xf32>
    %37 = arith.addf %35, %36 : vector<16x96xf32>
    %38 = vector.extract_strided_slice %37 {offsets = [0, 0], sizes = [16, 8], strides = [1, 1]} : vector<16x96xf32> to vector<16x8xf32>
    %39 = vector.shape_cast %38 : vector<16x8xf32> to vector<2x8x8xf32>
    %40 = vector.extract_strided_slice %37 {offsets = [0, 8], sizes = [16, 8], strides = [1, 1]} : vector<16x96xf32> to vector<16x8xf32>
    %41 = vector.shape_cast %40 : vector<16x8xf32> to vector<2x8x8xf32>
    %42 = vector.extract_strided_slice %37 {offsets = [0, 16], sizes = [16, 8], strides = [1, 1]} : vector<16x96xf32> to vector<16x8xf32>
    %43 = vector.shape_cast %42 : vector<16x8xf32> to vector<2x8x8xf32>
    %44 = vector.extract_strided_slice %37 {offsets = [0, 24], sizes = [16, 8], strides = [1, 1]} : vector<16x96xf32> to vector<16x8xf32>
    %45 = vector.shape_cast %44 : vector<16x8xf32> to vector<2x8x8xf32>
    %46 = tpu.concatenate %39, %41, %43, %45 in 0 : vector<2x8x8xf32>, vector<2x8x8xf32>, vector<2x8x8xf32>, vector<2x8x8xf32> -> vector<8x8x8xf32>
    %47 = vector.extract_strided_slice %37 {offsets = [0, 32], sizes = [16, 8], strides = [1, 1]} : vector<16x96xf32> to vector<16x8xf32>
    %48 = vector.shape_cast %47 : vector<16x8xf32> to vector<2x8x8xf32>
    %49 = vector.extract_strided_slice %37 {offsets = [0, 40], sizes = [16, 8], strides = [1, 1]} : vector<16x96xf32> to vector<16x8xf32>
    %50 = vector.shape_cast %49 : vector<16x8xf32> to vector<2x8x8xf32>
    %51 = vector.extract_strided_slice %37 {offsets = [0, 48], sizes = [16, 8], strides = [1, 1]} : vector<16x96xf32> to vector<16x8xf32>
    %52 = vector.shape_cast %51 : vector<16x8xf32> to vector<2x8x8xf32>
    %53 = vector.extract_strided_slice %37 {offsets = [0, 56], sizes = [16, 8], strides = [1, 1]} : vector<16x96xf32> to vector<16x8xf32>
    %54 = vector.shape_cast %53 : vector<16x8xf32> to vector<2x8x8xf32>
    %55 = tpu.concatenate %48, %50, %52, %54 in 0 : vector<2x8x8xf32>, vector<2x8x8xf32>, vector<2x8x8xf32>, vector<2x8x8xf32> -> vector<8x8x8xf32>
    %56 = vector.extract_strided_slice %37 {offsets = [0, 64], sizes = [16, 8], strides = [1, 1]} : vector<16x96xf32> to vector<16x8xf32>
    %57 = vector.shape_cast %56 : vector<16x8xf32> to vector<2x8x8xf32>
    %58 = vector.extract_strided_slice %37 {offsets = [0, 72], sizes = [16, 8], strides = [1, 1]} : vector<16x96xf32> to vector<16x8xf32>
    %59 = vector.shape_cast %58 : vector<16x8xf32> to vector<2x8x8xf32>
    %60 = vector.extract_strided_slice %37 {offsets = [0, 80], sizes = [16, 8], strides = [1, 1]} : vector<16x96xf32> to vector<16x8xf32>
    %61 = vector.shape_cast %60 : vector<16x8xf32> to vector<2x8x8xf32>
    %62 = vector.extract_strided_slice %37 {offsets = [0, 88], sizes = [16, 8], strides = [1, 1]} : vector<16x96xf32> to vector<16x8xf32>
    %63 = vector.shape_cast %62 : vector<16x8xf32> to vector<2x8x8xf32>
    %64 = tpu.concatenate %57, %59, %61, %63 in 0 : vector<2x8x8xf32>, vector<2x8x8xf32>, vector<2x8x8xf32>, vector<2x8x8xf32> -> vector<8x8x8xf32>
    "tpu.trace_start"() <{level = 10 : i32, message = "nqd,nkd->nqk"}> : () -> ()
    %cst_18 = arith.constant dense<0.000000e+00> : vector<8x8x8xf32>
    %65 = tpu.matmul %46, %55, %cst_18 {dimension_numbers = #tpu.dot_dimension_numbers<[2], [2], [1], [1], [0, 0, 0, 1, 1, 1], [0], [0]>} : vector<8x8x8xf32>, vector<8x8x8xf32>, vector<8x8x8xf32> -> vector<8x8x8xf32>
    "tpu.trace_stop"() : () -> ()
    %cst_19 = arith.constant 0.353553385 : f32
    %66 = vector.broadcast %cst_19 : f32 to vector<8x8x8xf32>
    %67 = arith.mulf %65, %66 : vector<8x8x8xf32>
    %c0_20 = arith.constant 0 : index
    %c0_21 = arith.constant 0 : index
    %68 = vector.load %arg1[%c0_20, %c0_21] : memref<2x8xf32, #tpu.memory_space<vmem>>, vector<2x8xf32>
    %cst_22 = arith.constant 0.000000e+00 : f32
    %69 = vector.broadcast %cst_22 : f32 to vector<2x8xf32>
    %70 = arith.cmpf oeq, %68, %69 : vector<2x8xf32>
    %cst_23 = arith.constant -1.000000e+09 : f32
    %cst_24 = arith.constant 0.000000e+00 : f32
    %71 = vector.broadcast %cst_23 : f32 to vector<2x8xf32>
    %72 = vector.broadcast %cst_24 : f32 to vector<2x8xf32>
    %73 = arith.select %70, %71, %72 : vector<2x8xi1>, vector<2x8xf32>
    %74 = vector.shape_cast %73 : vector<2x8xf32> to vector<1x2x8xf32>
    %75 = vector.shape_cast %74 : vector<1x2x8xf32> to vector<1x2x8xf32>
    %76 = vector.broadcast %75 : vector<1x2x8xf32> to vector<4x2x8xf32>
    %77 = vector.shape_cast %76 : vector<4x2x8xf32> to vector<8x8xf32>
    %78 = vector.shape_cast %77 : vector<8x8xf32> to vector<8x1x8xf32>
    %79 = vector.broadcast %78 : vector<8x1x8xf32> to vector<8x8x8xf32>
    %80 = arith.addf %67, %79 : vector<8x8x8xf32>
    %cst_25 = arith.constant dense<0xFF800000> : vector<8x8xf32>
    %81 = vector.multi_reduction <maximumf>, %80, %cst_25 [2] : vector<8x8x8xf32> to vector<8x8xf32>
    %82 = vector.shape_cast %81 : vector<8x8xf32> to vector<8x8x1xf32>
    %83 = vector.broadcast %82 : vector<8x8x1xf32> to vector<8x8x8xf32>
    %84 = arith.subf %80, %83 : vector<8x8x8xf32>
    %85 = math.exp %84 : vector<8x8x8xf32>
    %cst_26 = arith.constant dense<0.000000e+00> : vector<8x8xf32>
    %86 = vector.multi_reduction <add>, %85, %cst_26 [2] : vector<8x8x8xf32> to vector<8x8xf32>
    %87 = vector.shape_cast %86 : vector<8x8xf32> to vector<8x8x1xf32>
    %88 = tpu.reciprocal %87 {approx = true} : vector<8x8x1xf32> -> vector<8x8x1xf32>
    %89 = arith.mulf %87, %88 : vector<8x8x1xf32>
    %cst_27 = arith.constant 2.000000e+00 : f32
    %90 = vector.broadcast %cst_27 : f32 to vector<8x8x1xf32>
    %91 = arith.subf %90, %89 : vector<8x8x1xf32>
    %92 = arith.mulf %88, %91 : vector<8x8x1xf32>
    %93 = vector.broadcast %92 : vector<8x8x1xf32> to vector<8x8x8xf32>
    %94 = arith.mulf %85, %93 : vector<8x8x8xf32>
    "tpu.trace_start"() <{level = 10 : i32, message = "nqk,nkd->nqd"}> : () -> ()
    %cst_28 = arith.constant dense<0.000000e+00> : vector<8x8x8xf32>
    %95 = tpu.matmul %94, %64, %cst_28 {dimension_numbers = #tpu.dot_dimension_numbers<[2], [1], [1], [2], [0, 0, 0, 1, 1, 2], [0], [0]>} : vector<8x8x8xf32>, vector<8x8x8xf32>, vector<8x8x8xf32> -> vector<8x8x8xf32>
    "tpu.trace_stop"() : () -> ()
    %96 = vector.extract_strided_slice %95 {offsets = [0, 0, 0], sizes = [2, 8, 8], strides = [1, 1, 1]} : vector<8x8x8xf32> to vector<2x8x8xf32>
    %97 = vector.extract_strided_slice %95 {offsets = [2, 0, 0], sizes = [2, 8, 8], strides = [1, 1, 1]} : vector<8x8x8xf32> to vector<2x8x8xf32>
    %98 = vector.extract_strided_slice %95 {offsets = [4, 0, 0], sizes = [2, 8, 8], strides = [1, 1, 1]} : vector<8x8x8xf32> to vector<2x8x8xf32>
    %99 = vector.extract_strided_slice %95 {offsets = [6, 0, 0], sizes = [2, 8, 8], strides = [1, 1, 1]} : vector<8x8x8xf32> to vector<2x8x8xf32>
    %100 = tpu.concatenate %96, %97, %98, %99 in 2 : vector<2x8x8xf32>, vector<2x8x8xf32>, vector<2x8x8xf32>, vector<2x8x8xf32> -> vector<2x8x32xf32>
    %101 = vector.shape_cast %100 : vector<2x8x32xf32> to vector<16x32xf32>
    %c0_29 = arith.constant 0 : index
    %c0_30 = arith.constant 0 : index
    %102 = vector.load %arg3[%c0_29, %c0_30] : memref<32x32xf32, #tpu.memory_space<vmem>>, vector<32x32xf32>
    %cst_31 = arith.constant dense<0.000000e+00> : vector<16x32xf32>
    %103 = tpu.matmul %101, %102, %cst_31 {dimension_numbers = #tpu.dot_dimension_numbers<[1], [0], [0], [1], [0, 0, 1, 1], [], []>} : vector<16x32xf32>, vector<32x32xf32>, vector<16x32xf32> -> vector<16x32xf32>
    %104 = vector.broadcast %5 : vector<1x32xf32> to vector<16x32xf32>
    %105 = arith.addf %103, %104 : vector<16x32xf32>
    %106 = arith.addf %0, %105 : vector<16x32xf32>
    %cst_32 = arith.constant dense<0.000000e+00> : vector<16xf32>
    %107 = vector.multi_reduction <add>, %106, %cst_32 [1] : vector<16x32xf32> to vector<16xf32>
    %108 = vector.shape_cast %107 : vector<16xf32> to vector<16x1xf32>
    %cst_33 = arith.constant 3.200000e+01 : f32
    %109 = vector.broadcast %cst_33 : f32 to vector<16x1xf32>
    %110 = arith.divf %108, %109 : vector<16x1xf32>
    %111 = vector.broadcast %110 : vector<16x1xf32> to vector<16x32xf32>
    %112 = arith.subf %106, %111 : vector<16x32xf32>
    %113 = arith.mulf %112, %112 : vector<16x32xf32>
    %cst_34 = arith.constant dense<0.000000e+00> : vector<16xf32>
    %114 = vector.multi_reduction <add>, %113, %cst_34 [1] : vector<16x32xf32> to vector<16xf32>
    %115 = vector.shape_cast %114 : vector<16xf32> to vector<16x1xf32>
    %cst_35 = arith.constant 0.0322580636 : f32
    %116 = vector.broadcast %cst_35 : f32 to vector<16x1xf32>
    %117 = arith.mulf %115, %116 : vector<16x1xf32>
    %118 = math.sqrt %117 : vector<16x1xf32>
    %cst_36 = arith.constant 9.99999997E-7 : f32
    %119 = vector.broadcast %cst_36 : f32 to vector<16x1xf32>
    %120 = arith.addf %118, %119 : vector<16x1xf32>
    %121 = tpu.reciprocal %120 {approx = true} : vector<16x1xf32> -> vector<16x1xf32>
    %122 = arith.mulf %120, %121 : vector<16x1xf32>
    %cst_37 = arith.constant 2.000000e+00 : f32
    %123 = vector.broadcast %cst_37 : f32 to vector<16x1xf32>
    %124 = arith.subf %123, %122 : vector<16x1xf32>
    %125 = arith.mulf %121, %124 : vector<16x1xf32>
    %126 = vector.broadcast %3 : vector<1x32xf32> to vector<16x32xf32>
    %127 = arith.mulf %126, %112 : vector<16x32xf32>
    %128 = vector.broadcast %125 : vector<16x1xf32> to vector<16x32xf32>
    %129 = arith.mulf %127, %128 : vector<16x32xf32>
    %130 = vector.broadcast %4 : vector<1x32xf32> to vector<16x32xf32>
    %131 = arith.addf %129, %130 : vector<16x32xf32>
    %c0_38 = arith.constant 0 : index
    %c0_39 = arith.constant 0 : index
    %132 = vector.load %arg4[%c0_38, %c0_39] : memref<32x64xf32, #tpu.memory_space<vmem>>, vector<32x64xf32>
    %cst_40 = arith.constant dense<0.000000e+00> : vector<16x64xf32>
    %133 = tpu.matmul %131, %132, %cst_40 {dimension_numbers = #tpu.dot_dimension_numbers<[1], [0], [0], [1], [0, 0, 1, 1], [], []>} : vector<16x32xf32>, vector<32x64xf32>, vector<16x64xf32> -> vector<16x64xf32>
    %134 = vector.broadcast %8 : vector<1x64xf32> to vector<16x64xf32>
    %135 = arith.addf %133, %134 : vector<16x64xf32>
    %cst_41 = arith.constant 0.000000e+00 : f32
    %136 = vector.broadcast %cst_41 : f32 to vector<16x64xf32>
    %137 = arith.maximumf %135, %136 : vector<16x64xf32>
    %c0_42 = arith.constant 0 : index
    %c0_43 = arith.constant 0 : index
    %138 = vector.load %arg5[%c0_42, %c0_43] : memref<64x32xf32, #tpu.memory_space<vmem>>, vector<64x32xf32>
    %cst_44 = arith.constant dense<0.000000e+00> : vector<16x32xf32>
    %139 = tpu.matmul %137, %138, %cst_44 {dimension_numbers = #tpu.dot_dimension_numbers<[1], [0], [0], [1], [0, 0, 1, 1], [], []>} : vector<16x64xf32>, vector<64x32xf32>, vector<16x32xf32> -> vector<16x32xf32>
    %140 = vector.broadcast %6 : vector<1x32xf32> to vector<16x32xf32>
    %141 = arith.addf %139, %140 : vector<16x32xf32>
    %142 = arith.addf %106, %141 : vector<16x32xf32>
    %c0_45 = arith.constant 0 : index
    %c0_46 = arith.constant 0 : index
    %143 = vector.load %arg7[%c0_45, %c0_46] : memref<16x32xf32, #tpu.memory_space<vmem>>, vector<16x32xf32>
    tpu.vector_store %arg7[%c0_45, %c0_46], %142 {strides = array<i32>} : memref<16x32xf32, #tpu.memory_space<vmem>>, vector<16x32xf32>,
    return
  }
}

</mosaic_0001>

<llo_original>
// kernel: tpu_custom_call.1
$region0: #{tpu_custom_call.1}
  #allocation0 [shape = 'u32[]', space=smem, size = 0x4, offset = 0x4, fixed_abs, tag = 'smem constant byte address 0x4 - core index']
  #allocation1 [shape = 'u32[144,128]{1,0:T(1,128)}', space=vmem, size = 0x12000, scoped, tag = 'internal scratch']
  %s0 = inlined_call_operand.hbm [shape: f32[16,32], index: 0, kind: input, shape index: {}]
  %s1 = inlined_call_operand.vmem [shape: f32[2,8], index: 1, kind: input, shape index: {}]
  %s2 = inlined_call_operand.vmem [shape: f32[32,96], index: 2, kind: input, shape index: {}]
  %s3 = inlined_call_operand.vmem [shape: f32[32,32], index: 3, kind: input, shape index: {}]
  %s4 = inlined_call_operand.vmem [shape: f32[32,64], index: 4, kind: input, shape index: {}]
  %s5 = inlined_call_operand.vmem [shape: f32[64,32], index: 5, kind: input, shape index: {}]
  %s6 = inlined_call_operand.vmem [shape: f32[8,128], index: 6, kind: input, shape index: {}]
  %s7 = inlined_call_operand.hbm [shape: f32[16,32], index: 7, kind: output, shape index: {}]
  %s8 = sld [smem:[#allocation0]]
  $region42: #{tpu_custom_call.1} parent=0
    _
  %s10 = ssub.s32 1, %s8
  %s11 = scalar_select 0, %s10, %s8
  $region1: #{tpu_custom_call.1} parent=0
    #allocation2 [shape = 'u8[8192]{0}', space=vmem, size = 0x2000, scoped, tag = 'input window, operand 0, single buffered']
    #allocation3 [shape = 's32[1]{0}', space=sflag, size = 0x4, scoped, tag = 'scoped memory for tpu_custom_call.1']
    #allocation4 [shape = 's32[1]{0}', space=sflag, size = 0x4, scoped, tag = 'scoped memory for tpu_custom_call.1']
    #allocation5 [shape = 'u8[8192]{0}', space=vmem, size = 0x2000, scoped, tag = 'output window, operand 0, single buffered']
    %12 = vsyncpa [#allocation3], 0
    %13 = vsyncpa [#allocation4], 0
    // Predicated region
    $region2: #{tpu_custom_call.1} parent=1 // pred_check
      _
    $region3: #{tpu_custom_call.1} parent=1 // pred_check_branch
      %15 = sbr.rel (0) target = $region5
    $region4: #{tpu_custom_call.1} parent=1 // pred_region
      %s17 = ssub.s32 256, 256
      %18 = vsyncadd [#allocation3], %s17
      %s19 = sshll.u32 [#allocation2], 4
      %s20 = int_to_ptr.vmem [resolvable:$true] %s19
      %25 = dma.hbm_to_vmem [thread:$0]  %s0, 256, %s20, [#allocation3], 128, 128, 8
    $region5: #{tpu_custom_call.1} parent=1 // pred_fallthru
      _
    // Predicated region
    $region6: #{tpu_custom_call.1} parent=1 // pred_check
      _
    $region7: #{tpu_custom_call.1} parent=1 // pred_check_branch
      %27 = sbr.rel (0) target = $region9
    $region8: #{tpu_custom_call.1} parent=1 // pred_region
      _
    $region9: #{tpu_custom_call.1} parent=1 // pred_fallthru
      _
    // Predicated region
    $region10: #{tpu_custom_call.1} parent=1 // pred_check
      _
    $region11: #{tpu_custom_call.1} parent=1 // pred_check_branch
      %29 = sbr.rel (0) target = $region13
    $region12: #{tpu_custom_call.1} parent=1 // pred_region
      _
    $region13: #{tpu_custom_call.1} parent=1 // pred_fallthru
      _
    // Predicated region
    $region14: #{tpu_custom_call.1} parent=1 // pred_check
      _
    $region15: #{tpu_custom_call.1} parent=1 // pred_check_branch
      %31 = sbr.rel (0) target = $region17
    $region16: #{tpu_custom_call.1} parent=1 // pred_region
      _
    $region17: #{tpu_custom_call.1} parent=1 // pred_fallthru
      _
    // Predicated region
    $region18: #{tpu_custom_call.1} parent=1 // pred_check
      _
    $region19: #{tpu_custom_call.1} parent=1 // pred_check_branch
      %33 = sbr.rel (0) target = $region21
    $region20: #{tpu_custom_call.1} parent=1 // pred_region
      _
    $region21: #{tpu_custom_call.1} parent=1 // pred_fallthru
      _
    // Predicated region
    $region22: #{tpu_custom_call.1} parent=1 // pred_check
      _
    $region23: #{tpu_custom_call.1} parent=1 // pred_check_branch
      %35 = sbr.rel (0) target = $region25
    $region24: #{tpu_custom_call.1} parent=1 // pred_region
      _
    $region25: #{tpu_custom_call.1} parent=1 // pred_fallthru
      _
    // Predicated region
    $region26: #{tpu_custom_call.1} parent=1 // pred_check
      _
    $region27: #{tpu_custom_call.1} parent=1 // pred_check_branch
      %37 = sbr.rel (0) target = $region29
    $region28: #{tpu_custom_call.1} parent=1 // pred_region
      _
    $region29: #{tpu_custom_call.1} parent=1 // pred_fallthru
      _
    // Predicated region
    $region30: #{tpu_custom_call.1} parent=1 // pred_check
      _
    $region31: #{tpu_custom_call.1} parent=1 // pred_check_branch
      %39 = sbr.rel (0) target = $region33
    $region32: #{tpu_custom_call.1} parent=1 // pred_region
      %40 = dma.done [#allocation3], 256
    $region33: #{tpu_custom_call.1} parent=1 // pred_fallthru
      _
    %v41 = vld [vmem:[#allocation2] sm:$0xff]
    %v42 = vld [vmem:[#allocation2 + $0x8] sm:$0xff]
    %v43 = vld [vmem:[%s6] sm:$0x1]
    %v44 = vld [vmem:[%s6 + $0x1] sm:$0x1]
    %v45 = vld [vmem:[%s6 + $0x2] sm:$0x1]
    %v46 = vld [vmem:[%s6 + $0x3] sm:$0x1]
    %v47 = vld [vmem:[%s6 + $0x4] sm:$0x1]
    %v48 = vld [vmem:[%s6 + $0x5] sm:$0x1]
    %v49 = vld [vmem:[%s6 + $0x6] sm:$0x1]
    %v50 = vld [vmem:[%s6 + $0x7] sm:$0x1]
    %vm51 = vcmask 261120
    %v52 = vsel %vm51, %v41, 0.0
    %53 = vadd.xlane.f32.xlu0 %v52
    %v54 = vpop.xlane.xlu0 %53
    %v55 = vsel %vm51, %v42, 0.0
    %56 = vadd.xlane.f32.xlu0 %v55
    %v57 = vpop.xlane.xlu0 %56
    %v58 = vrcp.pop 32.0
    %v59 = vmul.f32 %v54, %v58
    %v60 = vmul.f32 %v57, %v58
    %v61 = vsub.f32 %v41, %v59
    %v62 = vsub.f32 %v42, %v60
    %v63 = vmul.f32 %v61, %v61
    %v64 = vmul.f32 %v62, %v62
    %v65 = vsel %vm51, %v63, 0.0
    %66 = vadd.xlane.f32.xlu0 %v65
    %v67 = vpop.xlane.xlu0 %66
    %v68 = vsel %vm51, %v64, 0.0
    %69 = vadd.xlane.f32.xlu0 %v68
    %v70 = vpop.xlane.xlu0 %69
    %v71 = vmul.f32 %v67, 0.032258064
    %v72 = vmul.f32 %v70, 0.032258064
    %v73 = vrsqrt.pop %v71
    %v74 = vmul.f32 %v71, %v73
    %vm75 = vcmp.eq.f32.partialorder %v71, inf
    %v76 = vsel %vm75, %v71, %v74
    %vm77 = vcmp.eq.f32.partialorder %v71, 0.0
    %v78 = vand.u32 %v71, 2147483648
    %v79 = vsel %vm77, %v78, %v76
    %v80 = vrsqrt.pop %v72
    %v81 = vmul.f32 %v72, %v80
    %vm82 = vcmp.eq.f32.partialorder %v72, inf
    %v83 = vsel %vm82, %v72, %v81
    %vm84 = vcmp.eq.f32.partialorder %v72, 0.0
    %v85 = vand.u32 %v72, 2147483648
    %v86 = vsel %vm84, %v85, %v83
    %v87 = vadd.f32 %v79, 1e-06
    %v88 = vadd.f32 %v86, 1e-06
    %v89 = vrcp.pop %v87
    %v90 = vrcp.pop %v88
    %v91 = vmul.f32 %v87, %v89
    %v92 = vmul.f32 %v88, %v90
    %v93 = vsub.f32 2.0, %v91
    %v94 = vsub.f32 2.0, %v92
    %v95 = vmul.f32 %v89, %v93
    %v96 = vmul.f32 %v90, %v94
    %v97 = vlaneseq
    %v98 = vshrl.u32 %v97, 7
    %v99 = vsub.s32 0, %v98
    %v100 = vrot.slane %v43, %v99
    %v101 = vmul.f32 %v100, %v61
    %v102 = vmul.f32 %v100, %v62
    %v103 = vmul.f32 %v101, %v95
    %v104 = vmul.f32 %v102, %v96
    %v105 = vlaneseq
    %v106 = vshrl.u32 %v105, 7
    %v107 = vsub.s32 0, %v106
    %v108 = vrot.slane %v44, %v107
    %v109 = vadd.f32 %v103, %v108
    %v110 = vadd.f32 %v104, %v108
    %v111 = vld [vmem:[%s2] sm:$0xff]
    %v112 = vld [vmem:[%s2 + $0x8] sm:$0xff]
    %v113 = vld [vmem:[%s2 + $0x10] sm:$0xff]
    %v114 = vld [vmem:[%s2 + $0x18] sm:$0xff]
    %v115 = vlaneseq
    %v116 = vshrl.u32 %v115, 7
    %v117 = vsub.s32 0, %v116
    %v118 = vrot.slane %v49, %v117
    %v120 = vsel %vm51, %v109, 0
    %v123 = vsel %vm51, %v110, 0
    %125 = vmatprep.subr.mxu0 0.0
    %126 = vmatpush1.msra.mxu0 %v111
    %127 = vmatprep.subr.mxu0 0.0
    %128 = vmatpush1.msra.mxu0 %v112
    %129 = vmatprep.subr.mxu0 0.0
    %130 = vmatpush1.msra.mxu0 %v113
    %131 = vmatprep.subr.mxu0 0.0
    %132 = vmatpush1.msra.mxu0 %v114
    %133 = vmatprep.subr.mxu0 0.0
    %134 = vmatpush1.msra.mxu0 0.0
    %135 = vmatprep.subr.mxu0 0.0
    %136 = vmatpush1.msra.mxu0 0.0
    %137 = vmatprep.subr.mxu0 0.0
    %138 = vmatpush1.msra.mxu0 0.0
    %139 = vmatprep.subr.mxu0 0.0
    %140 = vmatpush1.msra.mxu0 0.0
    %141 = vmatprep.subr.mxu0 0.0
    %142 = vmatpush1.msra.mxu0 0.0
    %143 = vmatprep.subr.mxu0 0.0
    %144 = vmatpush1.msra.mxu0 0.0
    %145 = vmatprep.subr.mxu0 0.0
    %146 = vmatpush1.msra.mxu0 0.0
    %147 = vmatprep.subr.mxu0 0.0
    %148 = vmatpush1.msra.mxu0 0.0
    %149 = vmatprep.subr.mxu0 0.0
    %150 = vmatpush1.msra.mxu0 0.0
    %151 = vmatprep.subr.mxu0 0.0
    %152 = vmatpush1.msra.mxu0 0.0
    %153 = vmatprep.subr.mxu0 0.0
    %154 = vmatpush1.msra.mxu0 0.0
    %155 = vmatprep.subr.mxu0 0.0
    %156 = vmatpush1.msra.mxu0 0.0
    %157 = vmatprep.subr.mxu0 0.0
    %158 = vmatpush1.msra.mxu0 0.0
    %159 = vmatprep.subr.mxu0 0.0
    %160 = vmatpush1.msra.mxu0 0.0
    %161 = vmatprep.subr.mxu0 0.0
    %162 = vmatpush1.msra.mxu0 0.0
    %163 = vmatprep.subr.mxu0 0.0
    %164 = vmatpush1.msra.mxu0 0.0
    %165 = vmatprep.subr.mxu0 0.0
    %166 = vmatpush1.msra.mxu0 0.0
    %167 = vmatprep.subr.mxu0 0.0
    %168 = vmatpush1.msra.mxu0 0.0
    %169 = vmatprep.subr.mxu0 0.0
    %170 = vmatpush1.msra.mxu0 0.0
    %171 = vmatprep.subr.mxu0 0.0
    %172 = vmatpush1.msra.mxu0 0.0
    %173 = vmatprep.subr.mxu0 0.0
    %174 = vmatpush1.msra.mxu0 0.0
    %175 = vmatprep.subr.mxu0 0.0
    %176 = vmatpush1.msra.mxu0 0.0
    %177 = vmatprep.subr.mxu0 0.0
    %178 = vmatpush1.msra.mxu0 0.0
    %179 = vmatprep.subr.mxu0 0.0
    %180 = vmatpush1.msra.mxu0 0.0
    %181 = vmatprep.subr.mxu0 0.0
    %182 = vmatpush1.msra.mxu0 0.0
    %183 = vmatprep.subr.mxu0 0.0
    %184 = vmatpush1.msra.mxu0 0.0
    %185 = vmatprep.subr.mxu0 0.0
    %186 = vmatpush1.msra.mxu0 0.0
    %187 = vmatprep.subr.mxu0 0.0
    %188 = vmatpush1.msra.mxu0 0.0
    %189 = vmatprep.mubr.f32.mxu0 0.0
    %190 = vmatmul.mubr.f32.gmra.mrb[0].mxu0 %v120
    %v191 = vpop.f32.mrb[0].mxu0
    %v192 = vadd.f32 %v118, %v191
    %v193 = vpop.f32.mrb[0].mxu0
    %194 = vmatprep.mubr.f32.mxu0 0.0
    %195 = vmatmul.mubr.f32.gmra.mrb[0].mxu0 %v123
    %v196 = vpop.f32.mrb[0].mxu0
    %v197 = vadd.f32 %v118, %v196
    %v198 = vpop.f32.mrb[0].mxu0
    %199 = vdwg.mxu0
    %202 = vrot.lane.b32.xlu0 %v192, 120
    %v203 = vpop.permute.xlu0 %202
    %204 = vrot.lane.b32.xlu0 %v197, 120
    %v205 = vpop.permute.xlu0 %204
    %206 = vrot.lane.b32.xlu0 %v192, 112
    %v207 = vpop.permute.xlu0 %206
    %208 = vrot.lane.b32.xlu0 %v197, 112
    %v209 = vpop.permute.xlu0 %208
    %210 = vrot.lane.b32.xlu0 %v192, 104
    %v211 = vpop.permute.xlu0 %210
    %212 = vrot.lane.b32.xlu0 %v197, 104
    %v213 = vpop.permute.xlu0 %212
    %214 = vrot.lane.b32.xlu0 %v192, 96
    %v215 = vpop.permute.xlu0 %214
    %vm216 = vcmask 64512
    %v217 = vsel %vm216, %v192, 0
    %v219 = vsel %vm216, %v215, 0
    %221 = vmatprep.subr.mxu0 0.0
    %222 = vmatpush1.xpose.msra.mxu0 %v219
    %223 = vmatprep.subr.mxu0 0.0
    %224 = vmatpush1.xpose.msra.mxu0 0.0
    %225 = vmatprep.subr.mxu0 0.0
    %226 = vmatpush1.xpose.msra.mxu0 0.0
    %227 = vmatprep.subr.mxu0 0.0
    %228 = vmatpush1.xpose.msra.mxu0 0.0
    %229 = vmatprep.subr.mxu0 0.0
    %230 = vmatpush1.xpose.msra.mxu0 0.0
    %231 = vmatprep.subr.mxu0 0.0
    %232 = vmatpush1.xpose.msra.mxu0 0.0
    %233 = vmatprep.subr.mxu0 0.0
    %234 = vmatpush1.xpose.msra.mxu0 0.0
    %235 = vmatprep.subr.mxu0 0.0
    %236 = vmatpush1.xpose.msra.mxu0 0.0
    %237 = vmatprep.subr.mxu0 0.0
    %238 = vmatpush1.xpose.msra.mxu0 0.0
    %239 = vmatprep.subr.mxu0 0.0
    %240 = vmatpush1.xpose.msra.mxu0 0.0
    %241 = vmatprep.subr.mxu0 0.0
    %242 = vmatpush1.xpose.msra.mxu0 0.0
    %243 = vmatprep.subr.mxu0 0.0
    %244 = vmatpush1.xpose.msra.mxu0 0.0
    %245 = vmatprep.subr.mxu0 0.0
    %246 = vmatpush1.xpose.msra.mxu0 0.0
    %247 = vmatprep.subr.mxu0 0.0
    %248 = vmatpush1.xpose.msra.mxu0 0.0
    %249 = vmatprep.subr.mxu0 0.0
    %250 = vmatpush1.xpose.msra.mxu0 0.0
    %251 = vmatprep.subr.mxu0 0.0
    %252 = vmatpush1.xpose.msra.mxu0 0.0
    %253 = vmatprep.subr.mxu0 0.0
    %254 = vmatpush1.xpose.msra.mxu0 0.0
    %255 = vmatprep.subr.mxu0 0.0
    %256 = vmatpush1.xpose.msra.mxu0 0.0
    %257 = vmatprep.subr.mxu0 0.0
    %258 = vmatpush1.xpose.msra.mxu0 0.0
    %259 = vmatprep.subr.mxu0 0.0
    %260 = vmatpush1.xpose.msra.mxu0 0.0
    %261 = vmatprep.subr.mxu0 0.0
    %262 = vmatpush1.xpose.msra.mxu0 0.0
    %263 = vmatprep.subr.mxu0 0.0
    %264 = vmatpush1.xpose.msra.mxu0 0.0
    %265 = vmatprep.subr.mxu0 0.0
    %266 = vmatpush1.xpose.msra.mxu0 0.0
    %267 = vmatprep.subr.mxu0 0.0
    %268 = vmatpush1.xpose.msra.mxu0 0.0
    %269 = vmatprep.subr.mxu0 0.0
    %270 = vmatpush1.xpose.msra.mxu0 0.0
    %271 = vmatprep.subr.mxu0 0.0
    %272 = vmatpush1.xpose.msra.mxu0 0.0
    %273 = vmatprep.subr.mxu0 0.0
    %274 = vmatpush1.xpose.msra.mxu0 0.0
    %275 = vmatprep.subr.mxu0 0.0
    %276 = vmatpush1.xpose.msra.mxu0 0.0
    %277 = vmatprep.subr.mxu0 0.0
    %278 = vmatpush1.xpose.msra.mxu0 0.0
    %279 = vmatprep.subr.mxu0 0.0
    %280 = vmatpush1.xpose.msra.mxu0 0.0
    %281 = vmatprep.subr.mxu0 0.0
    %282 = vmatpush1.xpose.msra.mxu0 0.0
    %283 = vmatprep.subr.mxu0 0.0
    %284 = vmatpush1.xpose.msra.mxu0 0.0
    %285 = vmatprep.mubr.f32.mxu0 0.0
    %286 = vmatmul.mubr.f32.gmra.mrb[0].mxu0 %v217
    %v287 = vpop.f32.mrb[0].mxu0
    %v288 = vadd.f32 0.0, %v287
    %v289 = vpop.f32.mrb[0].mxu0
    %290 = vdwg.mxu0
    %291 = vrot.lane.b32.xlu0 %v197, 96
    %v292 = vpop.permute.xlu0 %291
    %v293 = vsel %vm216, %v197, 0
    %v295 = vsel %vm216, %v292, 0
    %297 = vmatprep.subr.mxu0 0.0
    %298 = vmatpush1.xpose.msra.mxu0 %v295
    %299 = vmatprep.subr.mxu0 0.0
    %300 = vmatpush1.xpose.msra.mxu0 0.0
    %301 = vmatprep.subr.mxu0 0.0
    %302 = vmatpush1.xpose.msra.mxu0 0.0
    %303 = vmatprep.subr.mxu0 0.0
    %304 = vmatpush1.xpose.msra.mxu0 0.0
    %305 = vmatprep.subr.mxu0 0.0
    %306 = vmatpush1.xpose.msra.mxu0 0.0
    %307 = vmatprep.subr.mxu0 0.0
    %308 = vmatpush1.xpose.msra.mxu0 0.0
    %309 = vmatprep.subr.mxu0 0.0
    %310 = vmatpush1.xpose.msra.mxu0 0.0
    %311 = vmatprep.subr.mxu0 0.0
    %312 = vmatpush1.xpose.msra.mxu0 0.0
    %313 = vmatprep.subr.mxu0 0.0
    %314 = vmatpush1.xpose.msra.mxu0 0.0
    %315 = vmatprep.subr.mxu0 0.0
    %316 = vmatpush1.xpose.msra.mxu0 0.0
    %317 = vmatprep.subr.mxu0 0.0
    %318 = vmatpush1.xpose.msra.mxu0 0.0
    %319 = vmatprep.subr.mxu0 0.0
    %320 = vmatpush1.xpose.msra.mxu0 0.0
    %321 = vmatprep.subr.mxu0 0.0
    %322 = vmatpush1.xpose.msra.mxu0 0.0
    %323 = vmatprep.subr.mxu0 0.0
    %324 = vmatpush1.xpose.msra.mxu0 0.0
    %325 = vmatprep.subr.mxu0 0.0
    %326 = vmatpush1.xpose.msra.mxu0 0.0
    %327 = vmatprep.subr.mxu0 0.0
    %328 = vmatpush1.xpose.msra.mxu0 0.0
    %329 = vmatprep.subr.mxu0 0.0
    %330 = vmatpush1.xpose.msra.mxu0 0.0
    %331 = vmatprep.subr.mxu0 0.0
    %332 = vmatpush1.xpose.msra.mxu0 0.0
    %333 = vmatprep.subr.mxu0 0.0
    %334 = vmatpush1.xpose.msra.mxu0 0.0
    %335 = vmatprep.subr.mxu0 0.0
    %336 = vmatpush1.xpose.msra.mxu0 0.0
    %337 = vmatprep.subr.mxu0 0.0
    %338 = vmatpush1.xpose.msra.mxu0 0.0
    %339 = vmatprep.subr.mxu0 0.0
    %340 = vmatpush1.xpose.msra.mxu0 0.0
    %341 = vmatprep.subr.mxu0 0.0
    %342 = vmatpush1.xpose.msra.mxu0 0.0
    %343 = vmatprep.subr.mxu0 0.0
    %344 = vmatpush1.xpose.msra.mxu0 0.0
    %345 = vmatprep.subr.mxu0 0.0
    %346 = vmatpush1.xpose.msra.mxu0 0.0
    %347 = vmatprep.subr.mxu0 0.0
    %348 = vmatpush1.xpose.msra.mxu0 0.0
    %349 = vmatprep.subr.mxu0 0.0
    %350 = vmatpush1.xpose.msra.mxu0 0.0
    %351 = vmatprep.subr.mxu0 0.0
    %352 = vmatpush1.xpose.msra.mxu0 0.0
    %353 = vmatprep.subr.mxu0 0.0
    %354 = vmatpush1.xpose.msra.mxu0 0.0
    %355 = vmatprep.subr.mxu0 0.0
    %356 = vmatpush1.xpose.msra.mxu0 0.0
    %357 = vmatprep.subr.mxu0 0.0
    %358 = vmatpush1.xpose.msra.mxu0 0.0
    %359 = vmatprep.subr.mxu0 0.0
    %360 = vmatpush1.xpose.msra.mxu0 0.0
    %361 = vmatprep.mubr.f32.mxu0 0.0
    %362 = vmatmul.mubr.f32.gmra.mrb[0].mxu0 %v293
    %v363 = vpop.f32.mrb[0].mxu0
    %v364 = vadd.f32 0.0, %v363
    %v365 = vpop.f32.mrb[0].mxu0
    %366 = vdwg.mxu0
    %367 = vrot.lane.b32.xlu0 %v203, 96
    %v368 = vpop.permute.xlu0 %367
    %v369 = vsel %vm216, %v203, 0
    %v371 = vsel %vm216, %v368, 0
    %373 = vmatprep.subr.mxu0 0.0
    %374 = vmatpush1.xpose.msra.mxu0 %v371
    %375 = vmatprep.subr.mxu0 0.0
    %376 = vmatpush1.xpose.msra.mxu0 0.0
    %377 = vmatprep.subr.mxu0 0.0
    %378 = vmatpush1.xpose.msra.mxu0 0.0
    %379 = vmatprep.subr.mxu0 0.0
    %380 = vmatpush1.xpose.msra.mxu0 0.0
    %381 = vmatprep.subr.mxu0 0.0
    %382 = vmatpush1.xpose.msra.mxu0 0.0
    %383 = vmatprep.subr.mxu0 0.0
    %384 = vmatpush1.xpose.msra.mxu0 0.0
    %385 = vmatprep.subr.mxu0 0.0
    %386 = vmatpush1.xpose.msra.mxu0 0.0
    %387 = vmatprep.subr.mxu0 0.0
    %388 = vmatpush1.xpose.msra.mxu0 0.0
    %389 = vmatprep.subr.mxu0 0.0
    %390 = vmatpush1.xpose.msra.mxu0 0.0
    %391 = vmatprep.subr.mxu0 0.0
    %392 = vmatpush1.xpose.msra.mxu0 0.0
    %393 = vmatprep.subr.mxu0 0.0
    %394 = vmatpush1.xpose.msra.mxu0 0.0
    %395 = vmatprep.subr.mxu0 0.0
    %396 = vmatpush1.xpose.msra.mxu0 0.0
    %397 = vmatprep.subr.mxu0 0.0
    %398 = vmatpush1.xpose.msra.mxu0 0.0
    %399 = vmatprep.subr.mxu0 0.0
    %400 = vmatpush1.xpose.msra.mxu0 0.0
    %401 = vmatprep.subr.mxu0 0.0
    %402 = vmatpush1.xpose.msra.mxu0 0.0
    %403 = vmatprep.subr.mxu0 0.0
    %404 = vmatpush1.xpose.msra.mxu0 0.0
    %405 = vmatprep.subr.mxu0 0.0
    %406 = vmatpush1.xpose.msra.mxu0 0.0
    %407 = vmatprep.subr.mxu0 0.0
    %408 = vmatpush1.xpose.msra.mxu0 0.0
    %409 = vmatprep.subr.mxu0 0.0
    %410 = vmatpush1.xpose.msra.mxu0 0.0
    %411 = vmatprep.subr.mxu0 0.0
    %412 = vmatpush1.xpose.msra.mxu0 0.0
    %413 = vmatprep.subr.mxu0 0.0
    %414 = vmatpush1.xpose.msra.mxu0 0.0
    %415 = vmatprep.subr.mxu0 0.0
    %416 = vmatpush1.xpose.msra.mxu0 0.0
    %417 = vmatprep.subr.mxu0 0.0
    %418 = vmatpush1.xpose.msra.mxu0 0.0
    %419 = vmatprep.subr.mxu0 0.0
    %420 = vmatpush1.xpose.msra.mxu0 0.0
    %421 = vmatprep.subr.mxu0 0.0
    %422 = vmatpush1.xpose.msra.mxu0 0.0
    %423 = vmatprep.subr.mxu0 0.0
    %424 = vmatpush1.xpose.msra.mxu0 0.0
    %425 = vmatprep.subr.mxu0 0.0
    %426 = vmatpush1.xpose.msra.mxu0 0.0
    %427 = vmatprep.subr.mxu0 0.0
    %428 = vmatpush1.xpose.msra.mxu0 0.0
    %429 = vmatprep.subr.mxu0 0.0
    %430 = vmatpush1.xpose.msra.mxu0 0.0
    %431 = vmatprep.subr.mxu0 0.0
    %432 = vmatpush1.xpose.msra.mxu0 0.0
    %433 = vmatprep.subr.mxu0 0.0
    %434 = vmatpush1.xpose.msra.mxu0 0.0
    %435 = vmatprep.subr.mxu0 0.0
    %436 = vmatpush1.xpose.msra.mxu0 0.0
    %437 = vmatprep.mubr.f32.mxu0 0.0
    %438 = vmatmul.mubr.f32.gmra.mrb[0].mxu0 %v369
    %v439 = vpop.f32.mrb[0].mxu0
    %v440 = vadd.f32 0.0, %v439
    %v441 = vpop.f32.mrb[0].mxu0
    %442 = vdwg.mxu0
    %443 = vrot.lane.b32.xlu0 %v205, 96
    %v444 = vpop.permute.xlu0 %443
    %v445 = vsel %vm216, %v205, 0
    %v447 = vsel %vm216, %v444, 0
    %449 = vmatprep.subr.mxu0 0.0
    %450 = vmatpush1.xpose.msra.mxu0 %v447
    %451 = vmatprep.subr.mxu0 0.0
    %452 = vmatpush1.xpose.msra.mxu0 0.0
    %453 = vmatprep.subr.mxu0 0.0
    %454 = vmatpush1.xpose.msra.mxu0 0.0
    %455 = vmatprep.subr.mxu0 0.0
    %456 = vmatpush1.xpose.msra.mxu0 0.0
    %457 = vmatprep.subr.mxu0 0.0
    %458 = vmatpush1.xpose.msra.mxu0 0.0
    %459 = vmatprep.subr.mxu0 0.0
    %460 = vmatpush1.xpose.msra.mxu0 0.0
    %461 = vmatprep.subr.mxu0 0.0
    %462 = vmatpush1.xpose.msra.mxu0 0.0
    %463 = vmatprep.subr.mxu0 0.0
    %464 = vmatpush1.xpose.msra.mxu0 0.0
    %465 = vmatprep.subr.mxu0 0.0
    %466 = vmatpush1.xpose.msra.mxu0 0.0
    %467 = vmatprep.subr.mxu0 0.0
    %468 = vmatpush1.xpose.msra.mxu0 0.0
    %469 = vmatprep.subr.mxu0 0.0
    %470 = vmatpush1.xpose.msra.mxu0 0.0
    %471 = vmatprep.subr.mxu0 0.0
    %472 = vmatpush1.xpose.msra.mxu0 0.0
    %473 = vmatprep.subr.mxu0 0.0
    %474 = vmatpush1.xpose.msra.mxu0 0.0
    %475 = vmatprep.subr.mxu0 0.0
    %476 = vmatpush1.xpose.msra.mxu0 0.0
    %477 = vmatprep.subr.mxu0 0.0
    %478 = vmatpush1.xpose.msra.mxu0 0.0
    %479 = vmatprep.subr.mxu0 0.0
    %480 = vmatpush1.xpose.msra.mxu0 0.0
    %481 = vmatprep.subr.mxu0 0.0
    %482 = vmatpush1.xpose.msra.mxu0 0.0
    %483 = vmatprep.subr.mxu0 0.0
    %484 = vmatpush1.xpose.msra.mxu0 0.0
    %485 = vmatprep.subr.mxu0 0.0
    %486 = vmatpush1.xpose.msra.mxu0 0.0
    %487 = vmatprep.subr.mxu0 0.0
    %488 = vmatpush1.xpose.msra.mxu0 0.0
    %489 = vmatprep.subr.mxu0 0.0
    %490 = vmatpush1.xpose.msra.mxu0 0.0
    %491 = vmatprep.subr.mxu0 0.0
    %492 = vmatpush1.xpose.msra.mxu0 0.0
    %493 = vmatprep.subr.mxu0 0.0
    %494 = vmatpush1.xpose.msra.mxu0 0.0
    %495 = vmatprep.subr.mxu0 0.0
    %496 = vmatpush1.xpose.msra.mxu0 0.0
    %497 = vmatprep.subr.mxu0 0.0
    %498 = vmatpush1.xpose.msra.mxu0 0.0
    %499 = vmatprep.subr.mxu0 0.0
    %500 = vmatpush1.xpose.msra.mxu0 0.0
    %501 = vmatprep.subr.mxu0 0.0
    %502 = vmatpush1.xpose.msra.mxu0 0.0
    %503 = vmatprep.subr.mxu0 0.0
    %504 = vmatpush1.xpose.msra.mxu0 0.0
    %505 = vmatprep.subr.mxu0 0.0
    %506 = vmatpush1.xpose.msra.mxu0 0.0
    %507 = vmatprep.subr.mxu0 0.0
    %508 = vmatpush1.xpose.msra.mxu0 0.0
    %509 = vmatprep.subr.mxu0 0.0
    %510 = vmatpush1.xpose.msra.mxu0 0.0
    %511 = vmatprep.subr.mxu0 0.0
    %512 = vmatpush1.xpose.msra.mxu0 0.0
    %513 = vmatprep.mubr.f32.mxu0 0.0
    %514 = vmatmul.mubr.f32.gmra.mrb[0].mxu0 %v445
    %v515 = vpop.f32.mrb[0].mxu0
    %v516 = vadd.f32 0.0, %v515
    %v517 = vpop.f32.mrb[0].mxu0
    %518 = vdwg.mxu0
    %519 = vrot.lane.b32.xlu0 %v207, 96
    %v520 = vpop.permute.xlu0 %519
    %v521 = vsel %vm216, %v207, 0
    %v523 = vsel %vm216, %v520, 0
    %525 = vmatprep.subr.mxu0 0.0
    %526 = vmatpush1.xpose.msra.mxu0 %v523
    %527 = vmatprep.subr.mxu0 0.0
    %528 = vmatpush1.xpose.msra.mxu0 0.0
    %529 = vmatprep.subr.mxu0 0.0
    %530 = vmatpush1.xpose.msra.mxu0 0.0
    %531 = vmatprep.subr.mxu0 0.0
    %532 = vmatpush1.xpose.msra.mxu0 0.0
    %533 = vmatprep.subr.mxu0 0.0
    %534 = vmatpush1.xpose.msra.mxu0 0.0
    %535 = vmatprep.subr.mxu0 0.0
    %536 = vmatpush1.xpose.msra.mxu0 0.0
    %537 = vmatprep.subr.mxu0 0.0
    %538 = vmatpush1.xpose.msra.mxu0 0.0
    %539 = vmatprep.subr.mxu0 0.0
    %540 = vmatpush1.xpose.msra.mxu0 0.0
    %541 = vmatprep.subr.mxu0 0.0
    %542 = vmatpush1.xpose.msra.mxu0 0.0
    %543 = vmatprep.subr.mxu0 0.0
    %544 = vmatpush1.xpose.msra.mxu0 0.0
    %545 = vmatprep.subr.mxu0 0.0
    %546 = vmatpush1.xpose.msra.mxu0 0.0
    %547 = vmatprep.subr.mxu0 0.0
    %548 = vmatpush1.xpose.msra.mxu0 0.0
    %549 = vmatprep.subr.mxu0 0.0
    %550 = vmatpush1.xpose.msra.mxu0 0.0
    %551 = vmatprep.subr.mxu0 0.0
    %552 = vmatpush1.xpose.msra.mxu0 0.0
    %553 = vmatprep.subr.mxu0 0.0
    %554 = vmatpush1.xpose.msra.mxu0 0.0
    %555 = vmatprep.subr.mxu0 0.0
    %556 = vmatpush1.xpose.msra.mxu0 0.0
    %557 = vmatprep.subr.mxu0 0.0
    %558 = vmatpush1.xpose.msra.mxu0 0.0
    %559 = vmatprep.subr.mxu0 0.0
    %560 = vmatpush1.xpose.msra.mxu0 0.0
    %561 = vmatprep.subr.mxu0 0.0
    %562 = vmatpush1.xpose.msra.mxu0 0.0
    %563 = vmatprep.subr.mxu0 0.0
    %564 = vmatpush1.xpose.msra.mxu0 0.0
    %565 = vmatprep.subr.mxu0 0.0
    %566 = vmatpush1.xpose.msra.mxu0 0.0
    %567 = vmatprep.subr.mxu0 0.0
    %568 = vmatpush1.xpose.msra.mxu0 0.0
    %569 = vmatprep.subr.mxu0 0.0
    %570 = vmatpush1.xpose.msra.mxu0 0.0
    %571 = vmatprep.subr.mxu0 0.0
    %572 = vmatpush1.xpose.msra.mxu0 0.0
    %573 = vmatprep.subr.mxu0 0.0
    %574 = vmatpush1.xpose.msra.mxu0 0.0
    %575 = vmatprep.subr.mxu0 0.0
    %576 = vmatpush1.xpose.msra.mxu0 0.0
    %577 = vmatprep.subr.mxu0 0.0
    %578 = vmatpush1.xpose.msra.mxu0 0.0
    %579 = vmatprep.subr.mxu0 0.0
    %580 = vmatpush1.xpose.msra.mxu0 0.0
    %581 = vmatprep.subr.mxu0 0.0
    %582 = vmatpush1.xpose.msra.mxu0 0.0
    %583 = vmatprep.subr.mxu0 0.0
    %584 = vmatpush1.xpose.msra.mxu0 0.0
    %585 = vmatprep.subr.mxu0 0.0
    %586 = vmatpush1.xpose.msra.mxu0 0.0
    %587 = vmatprep.subr.mxu0 0.0
    %588 = vmatpush1.xpose.msra.mxu0 0.0
    %589 = vmatprep.mubr.f32.mxu0 0.0
    %590 = vmatmul.mubr.f32.gmra.mrb[0].mxu0 %v521
    %v591 = vpop.f32.mrb[0].mxu0
    %v592 = vadd.f32 0.0, %v591
    %v593 = vpop.f32.mrb[0].mxu0
    %594 = vdwg.mxu0
    %595 = vrot.lane.b32.xlu0 %v209, 96
    %v596 = vpop.permute.xlu0 %595
    %v597 = vsel %vm216, %v209, 0
    %v599 = vsel %vm216, %v596, 0
    %601 = vmatprep.subr.mxu0 0.0
    %602 = vmatpush1.xpose.msra.mxu0 %v599
    %603 = vmatprep.subr.mxu0 0.0
    %604 = vmatpush1.xpose.msra.mxu0 0.0
    %605 = vmatprep.subr.mxu0 0.0
    %606 = vmatpush1.xpose.msra.mxu0 0.0
    %607 = vmatprep.subr.mxu0 0.0
    %608 = vmatpush1.xpose.msra.mxu0 0.0
    %609 = vmatprep.subr.mxu0 0.0
    %610 = vmatpush1.xpose.msra.mxu0 0.0
    %611 = vmatprep.subr.mxu0 0.0
    %612 = vmatpush1.xpose.msra.mxu0 0.0
    %613 = vmatprep.subr.mxu0 0.0
    %614 = vmatpush1.xpose.msra.mxu0 0.0
    %615 = vmatprep.subr.mxu0 0.0
    %616 = vmatpush1.xpose.msra.mxu0 0.0
    %617 = vmatprep.subr.mxu0 0.0
    %618 = vmatpush1.xpose.msra.mxu0 0.0
    %619 = vmatprep.subr.mxu0 0.0
    %620 = vmatpush1.xpose.msra.mxu0 0.0
    %621 = vmatprep.subr.mxu0 0.0
    %622 = vmatpush1.xpose.msra.mxu0 0.0
    %623 = vmatprep.subr.mxu0 0.0
    %624 = vmatpush1.xpose.msra.mxu0 0.0
    %625 = vmatprep.subr.mxu0 0.0
    %626 = vmatpush1.xpose.msra.mxu0 0.0
    %627 = vmatprep.subr.mxu0 0.0
    %628 = vmatpush1.xpose.msra.mxu0 0.0
    %629 = vmatprep.subr.mxu0 0.0
    %630 = vmatpush1.xpose.msra.mxu0 0.0
    %631 = vmatprep.subr.mxu0 0.0
    %632 = vmatpush1.xpose.msra.mxu0 0.0
    %633 = vmatprep.subr.mxu0 0.0
    %634 = vmatpush1.xpose.msra.mxu0 0.0
    %635 = vmatprep.subr.mxu0 0.0
    %636 = vmatpush1.xpose.msra.mxu0 0.0
    %637 = vmatprep.subr.mxu0 0.0
    %638 = vmatpush1.xpose.msra.mxu0 0.0
    %639 = vmatprep.subr.mxu0 0.0
    %640 = vmatpush1.xpose.msra.mxu0 0.0
    %641 = vmatprep.subr.mxu0 0.0
    %642 = vmatpush1.xpose.msra.mxu0 0.0
    %643 = vmatprep.subr.mxu0 0.0
    %644 = vmatpush1.xpose.msra.mxu0 0.0
    %645 = vmatprep.subr.mxu0 0.0
    %646 = vmatpush1.xpose.msra.mxu0 0.0
    %647 = vmatprep.subr.mxu0 0.0
    %648 = vmatpush1.xpose.msra.mxu0 0.0
    %649 = vmatprep.subr.mxu0 0.0
    %650 = vmatpush1.xpose.msra.mxu0 0.0
    %651 = vmatprep.subr.mxu0 0.0
    %652 = vmatpush1.xpose.msra.mxu0 0.0
    %653 = vmatprep.subr.mxu0 0.0
    %654 = vmatpush1.xpose.msra.mxu0 0.0
    %655 = vmatprep.subr.mxu0 0.0
    %656 = vmatpush1.xpose.msra.mxu0 0.0
    %657 = vmatprep.subr.mxu0 0.0
    %658 = vmatpush1.xpose.msra.mxu0 0.0
    %659 = vmatprep.subr.mxu0 0.0
    %660 = vmatpush1.xpose.msra.mxu0 0.0
    %661 = vmatprep.subr.mxu0 0.0
    %662 = vmatpush1.xpose.msra.mxu0 0.0
    %663 = vmatprep.subr.mxu0 0.0
    %664 = vmatpush1.xpose.msra.mxu0 0.0
    %665 = vmatprep.mubr.f32.mxu0 0.0
    %666 = vmatmul.mubr.f32.gmra.mrb[0].mxu0 %v597
    %v667 = vpop.f32.mrb[0].mxu0
    %v668 = vadd.f32 0.0, %v667
    %v669 = vpop.f32.mrb[0].mxu0
    %670 = vdwg.mxu0
    %671 = vrot.lane.b32.xlu0 %v211, 96
    %v672 = vpop.permute.xlu0 %671
    %v673 = vsel %vm216, %v211, 0
    %v675 = vsel %vm216, %v672, 0
    %677 = vmatprep.subr.mxu0 0.0
    %678 = vmatpush1.xpose.msra.mxu0 %v675
    %679 = vmatprep.subr.mxu0 0.0
    %680 = vmatpush1.xpose.msra.mxu0 0.0
    %681 = vmatprep.subr.mxu0 0.0
    %682 = vmatpush1.xpose.msra.mxu0 0.0
    %683 = vmatprep.subr.mxu0 0.0
    %684 = vmatpush1.xpose.msra.mxu0 0.0
    %685 = vmatprep.subr.mxu0 0.0
    %686 = vmatpush1.xpose.msra.mxu0 0.0
    %687 = vmatprep.subr.mxu0 0.0
    %688 = vmatpush1.xpose.msra.mxu0 0.0
    %689 = vmatprep.subr.mxu0 0.0
    %690 = vmatpush1.xpose.msra.mxu0 0.0
    %691 = vmatprep.subr.mxu0 0.0
    %692 = vmatpush1.xpose.msra.mxu0 0.0
    %693 = vmatprep.subr.mxu0 0.0
    %694 = vmatpush1.xpose.msra.mxu0 0.0
    %695 = vmatprep.subr.mxu0 0.0
    %696 = vmatpush1.xpose.msra.mxu0 0.0
    %697 = vmatprep.subr.mxu0 0.0
    %698 = vmatpush1.xpose.msra.mxu0 0.0
    %699 = vmatprep.subr.mxu0 0.0
    %700 = vmatpush1.xpose.msra.mxu0 0.0
    %701 = vmatprep.subr.mxu0 0.0
    %702 = vmatpush1.xpose.msra.mxu0 0.0
    %703 = vmatprep.subr.mxu0 0.0
    %704 = vmatpush1.xpose.msra.mxu0 0.0
    %705 = vmatprep.subr.mxu0 0.0
    %706 = vmatpush1.xpose.msra.mxu0 0.0
    %707 = vmatprep.subr.mxu0 0.0
    %708 = vmatpush1.xpose.msra.mxu0 0.0
    %709 = vmatprep.subr.mxu0 0.0
    %710 = vmatpush1.xpose.msra.mxu0 0.0
    %711 = vmatprep.subr.mxu0 0.0
    %712 = vmatpush1.xpose.msra.mxu0 0.0
    %713 = vmatprep.subr.mxu0 0.0
    %714 = vmatpush1.xpose.msra.mxu0 0.0
    %715 = vmatprep.subr.mxu0 0.0
    %716 = vmatpush1.xpose.msra.mxu0 0.0
    %717 = vmatprep.subr.mxu0 0.0
    %718 = vmatpush1.xpose.msra.mxu0 0.0
    %719 = vmatprep.subr.mxu0 0.0
    %720 = vmatpush1.xpose.msra.mxu0 0.0
    %721 = vmatprep.subr.mxu0 0.0
    %722 = vmatpush1.xpose.msra.mxu0 0.0
    %723 = vmatprep.subr.mxu0 0.0
    %724 = vmatpush1.xpose.msra.mxu0 0.0
    %725 = vmatprep.subr.mxu0 0.0
    %726 = vmatpush1.xpose.msra.mxu0 0.0
    %727 = vmatprep.subr.mxu0 0.0
    %728 = vmatpush1.xpose.msra.mxu0 0.0
    %729 = vmatprep.subr.mxu0 0.0
    %730 = vmatpush1.xpose.msra.mxu0 0.0
    %731 = vmatprep.subr.mxu0 0.0
    %732 = vmatpush1.xpose.msra.mxu0 0.0
    %733 = vmatprep.subr.mxu0 0.0
    %734 = vmatpush1.xpose.msra.mxu0 0.0
    %735 = vmatprep.subr.mxu0 0.0
    %736 = vmatpush1.xpose.msra.mxu0 0.0
    %737 = vmatprep.subr.mxu0 0.0
    %738 = vmatpush1.xpose.msra.mxu0 0.0
    %739 = vmatprep.subr.mxu0 0.0
    %740 = vmatpush1.xpose.msra.mxu0 0.0
    %741 = vmatprep.mubr.f32.mxu0 0.0
    %742 = vmatmul.mubr.f32.gmra.mrb[0].mxu0 %v673
    %v743 = vpop.f32.mrb[0].mxu0
    %v744 = vadd.f32 0.0, %v743
    %v745 = vpop.f32.mrb[0].mxu0
    %746 = vdwg.mxu0
    %747 = vrot.lane.b32.xlu0 %v213, 96
    %v748 = vpop.permute.xlu0 %747
    %v749 = vsel %vm216, %v213, 0
    %v751 = vsel %vm216, %v748, 0
    %753 = vmatprep.subr.mxu0 0.0
    %754 = vmatpush1.xpose.msra.mxu0 %v751
    %755 = vmatprep.subr.mxu0 0.0
    %756 = vmatpush1.xpose.msra.mxu0 0.0
    %757 = vmatprep.subr.mxu0 0.0
    %758 = vmatpush1.xpose.msra.mxu0 0.0
    %759 = vmatprep.subr.mxu0 0.0
    %760 = vmatpush1.xpose.msra.mxu0 0.0
    %761 = vmatprep.subr.mxu0 0.0
    %762 = vmatpush1.xpose.msra.mxu0 0.0
    %763 = vmatprep.subr.mxu0 0.0
    %764 = vmatpush1.xpose.msra.mxu0 0.0
    %765 = vmatprep.subr.mxu0 0.0
    %766 = vmatpush1.xpose.msra.mxu0 0.0
    %767 = vmatprep.subr.mxu0 0.0
    %768 = vmatpush1.xpose.msra.mxu0 0.0
    %769 = vmatprep.subr.mxu0 0.0
    %770 = vmatpush1.xpose.msra.mxu0 0.0
    %771 = vmatprep.subr.mxu0 0.0
    %772 = vmatpush1.xpose.msra.mxu0 0.0
    %773 = vmatprep.subr.mxu0 0.0
    %774 = vmatpush1.xpose.msra.mxu0 0.0
    %775 = vmatprep.subr.mxu0 0.0
    %776 = vmatpush1.xpose.msra.mxu0 0.0
    %777 = vmatprep.subr.mxu0 0.0
    %778 = vmatpush1.xpose.msra.mxu0 0.0
    %779 = vmatprep.subr.mxu0 0.0
    %780 = vmatpush1.xpose.msra.mxu0 0.0
    %781 = vmatprep.subr.mxu0 0.0
    %782 = vmatpush1.xpose.msra.mxu0 0.0
    %783 = vmatprep.subr.mxu0 0.0
    %784 = vmatpush1.xpose.msra.mxu0 0.0
    %785 = vmatprep.subr.mxu0 0.0
    %786 = vmatpush1.xpose.msra.mxu0 0.0
    %787 = vmatprep.subr.mxu0 0.0
    %788 = vmatpush1.xpose.msra.mxu0 0.0
    %789 = vmatprep.subr.mxu0 0.0
    %790 = vmatpush1.xpose.msra.mxu0 0.0
    %791 = vmatprep.subr.mxu0 0.0
    %792 = vmatpush1.xpose.msra.mxu0 0.0
    %793 = vmatprep.subr.mxu0 0.0
    %794 = vmatpush1.xpose.msra.mxu0 0.0
    %795 = vmatprep.subr.mxu0 0.0
    %796 = vmatpush1.xpose.msra.mxu0 0.0
    %797 = vmatprep.subr.mxu0 0.0
    %798 = vmatpush1.xpose.msra.mxu0 0.0
    %799 = vmatprep.subr.mxu0 0.0
    %800 = vmatpush1.xpose.msra.mxu0 0.0
    %801 = vmatprep.subr.mxu0 0.0
    %802 = vmatpush1.xpose.msra.mxu0 0.0
    %803 = vmatprep.subr.mxu0 0.0
    %804 = vmatpush1.xpose.msra.mxu0 0.0
    %805 = vmatprep.subr.mxu0 0.0
    %806 = vmatpush1.xpose.msra.mxu0 0.0
    %807 = vmatprep.subr.mxu0 0.0
    %808 = vmatpush1.xpose.msra.mxu0 0.0
    %809 = vmatprep.subr.mxu0 0.0
    %810 = vmatpush1.xpose.msra.mxu0 0.0
    %811 = vmatprep.subr.mxu0 0.0
    %812 = vmatpush1.xpose.msra.mxu0 0.0
    %813 = vmatprep.subr.mxu0 0.0
    %814 = vmatpush1.xpose.msra.mxu0 0.0
    %815 = vmatprep.subr.mxu0 0.0
    %816 = vmatpush1.xpose.msra.mxu0 0.0
    %817 = vmatprep.mubr.f32.mxu0 0.0
    %818 = vmatmul.mubr.f32.gmra.mrb[0].mxu0 %v749
    %v819 = vpop.f32.mrb[0].mxu0
    %v820 = vadd.f32 0.0, %v819
    %v821 = vpop.f32.mrb[0].mxu0
    %822 = vdwg.mxu0
    %v823 = vmul.f32 %v288, 0.35355338
    %v824 = vmul.f32 %v364, 0.35355338
    %v825 = vmul.f32 %v440, 0.35355338
    %v826 = vmul.f32 %v516, 0.35355338
    %v827 = vmul.f32 %v592, 0.35355338
    %v828 = vmul.f32 %v668, 0.35355338
    %v829 = vmul.f32 %v744, 0.35355338
    %v830 = vmul.f32 %v820, 0.35355338
    %v831 = vld [vmem:[%s1] sm:$0x3]
    %vm832 = vcmp.eq.f32.partialorder %v831, 0.0
    %v833 = vsel %vm832, -1e+09, 0.0
    %v836 = vunpack.c.l.s4 1966171168
    %v837 = vunpack.c.0.s8 %v836
    %v838 = vlaneseq
    %v839 = vshrl.u32 %v838, 7
    %v840 = vsub.s32 %v837, %v839
    %v841 = vrot.slane %v833, %v840
    %v842 = vcombine.high %v841, %v841
    %v844 = vunpack.c.l.s4 1966171168
    %v845 = vunpack.c.0.s8 %v844
    %v846 = vlaneseq
    %v847 = vshrl.u32 %v846, 7
    %v848 = vsub.s32 %v845, %v847
    %v849 = vrot.slane %v841, %v848
    %v851 = vunpack.c.l.s4 1966171168
    %v852 = vunpack.c.0.s8 %v851
    %v853 = vlaneseq
    %v854 = vshrl.u32 %v853, 7
    %v855 = vsub.s32 %v852, %v854
    %v856 = vrot.slane %v842, %v855
    %v857 = vlaneseq
    %v858 = vshrl.u32 %v857, 7
    %v859 = vsub.s32 0, %v858
    %v860 = vrot.slane %v849, %v859
    %v861 = vlaneseq
    %v862 = vshrl.u32 %v861, 7
    %v863 = vsub.s32 0, %v862
    %v864 = vrot.slane %v856, %v863
    %v867 = vadd.f32 %v823, %v860
    %v868 = vadd.f32 %v824, %v864
    %v869 = vadd.f32 %v825, %v860
    %v870 = vadd.f32 %v826, %v864
    %v871 = vadd.f32 %v827, %v860
    %v872 = vadd.f32 %v828, %v864
    %v873 = vadd.f32 %v829, %v860
    %v874 = vadd.f32 %v830, %v864
    %v875 = vsel %vm216, %v867, -inf
    %876 = vmax.xlane.f32.xlu0 %v875
    %v877 = vpop.xlane.xlu0 %876
    %v878 = vsel %vm216, %v868, -inf
    %879 = vmax.xlane.f32.xlu0 %v878
    %v880 = vpop.xlane.xlu0 %879
    %v881 = vsel %vm216, %v869, -inf
    %882 = vmax.xlane.f32.xlu0 %v881
    %v883 = vpop.xlane.xlu0 %882
    %v884 = vsel %vm216, %v870, -inf
    %885 = vmax.xlane.f32.xlu0 %v884
    %v886 = vpop.xlane.xlu0 %885
    %v887 = vsel %vm216, %v871, -inf
    %888 = vmax.xlane.f32.xlu0 %v887
    %v889 = vpop.xlane.xlu0 %888
    %v890 = vsel %vm216, %v872, -inf
    %891 = vmax.xlane.f32.xlu0 %v890
    %v892 = vpop.xlane.xlu0 %891
    %v893 = vsel %vm216, %v873, -inf
    %894 = vmax.xlane.f32.xlu0 %v893
    %v895 = vpop.xlane.xlu0 %894
    %v896 = vsel %vm216, %v874, -inf
    %897 = vmax.xlane.f32.xlu0 %v896
    %v898 = vpop.xlane.xlu0 %897
    %v899 = vsub.f32 %v867, %v877
    %v900 = vsub.f32 %v868, %v880
    %v901 = vsub.f32 %v869, %v883
    %v902 = vsub.f32 %v870, %v886
    %v903 = vsub.f32 %v871, %v889
    %v904 = vsub.f32 %v872, %v892
    %v905 = vsub.f32 %v873, %v895
    %v906 = vsub.f32 %v874, %v898
    %v907 = vmul.f32 %v899, 1.442695
    %v908 = vpow.pop %v907
    %v909 = vmul.f32 %v900, 1.442695
    %v910 = vpow.pop %v909
    %v911 = vmul.f32 %v901, 1.442695
    %v912 = vpow.pop %v911
    %v913 = vmul.f32 %v902, 1.442695
    %v914 = vpow.pop %v913
    %v915 = vmul.f32 %v903, 1.442695
    %v916 = vpow.pop %v915
    %v917 = vmul.f32 %v904, 1.442695
    %v918 = vpow.pop %v917
    %v919 = vmul.f32 %v905, 1.442695
    %v920 = vpow.pop %v919
    %v921 = vmul.f32 %v906, 1.442695
    %v922 = vpow.pop %v921
    %v923 = vsel %vm216, %v908, 0.0
    %924 = vadd.xlane.f32.xlu0 %v923
    %v925 = vpop.xlane.xlu0 %924
    %v926 = vsel %vm216, %v910, 0.0
    %927 = vadd.xlane.f32.xlu0 %v926
    %v928 = vpop.xlane.xlu0 %927
    %v929 = vsel %vm216, %v912, 0.0
    %930 = vadd.xlane.f32.xlu0 %v929
    %v931 = vpop.xlane.xlu0 %930
    %v932 = vsel %vm216, %v914, 0.0
    %933 = vadd.xlane.f32.xlu0 %v932
    %v934 = vpop.xlane.xlu0 %933
    %v935 = vsel %vm216, %v916, 0.0
    %936 = vadd.xlane.f32.xlu0 %v935
    %v937 = vpop.xlane.xlu0 %936
    %v938 = vsel %vm216, %v918, 0.0
    %939 = vadd.xlane.f32.xlu0 %v938
    %v940 = vpop.xlane.xlu0 %939
    %v941 = vsel %vm216, %v920, 0.0
    %942 = vadd.xlane.f32.xlu0 %v941
    %v943 = vpop.xlane.xlu0 %942
    %v944 = vsel %vm216, %v922, 0.0
    %945 = vadd.xlane.f32.xlu0 %v944
    %v946 = vpop.xlane.xlu0 %945
    %v947 = vrcp.pop %v925
    %v948 = vrcp.pop %v928
    %v949 = vrcp.pop %v931
    %v950 = vrcp.pop %v934
    %v951 = vrcp.pop %v937
    %v952 = vrcp.pop %v940
    %v953 = vrcp.pop %v943
    %v954 = vrcp.pop %v946
    %v955 = vmul.f32 %v925, %v947
    %v956 = vmul.f32 %v928, %v948
    %v957 = vmul.f32 %v931, %v949
    %v958 = vmul.f32 %v934, %v950
    %v959 = vmul.f32 %v937, %v951
    %v960 = vmul.f32 %v940, %v952
    %v961 = vmul.f32 %v943, %v953
    %v962 = vmul.f32 %v946, %v954
    %v963 = vsub.f32 2.0, %v955
    %v964 = vsub.f32 2.0, %v956
    %v965 = vsub.f32 2.0, %v957
    %v966 = vsub.f32 2.0, %v958
    %v967 = vsub.f32 2.0, %v959
    %v968 = vsub.f32 2.0, %v960
    %v969 = vsub.f32 2.0, %v961
    %v970 = vsub.f32 2.0, %v962
    %v971 = vmul.f32 %v947, %v963
    %v972 = vmul.f32 %v948, %v964
    %v973 = vmul.f32 %v949, %v965
    %v974 = vmul.f32 %v950, %v966
    %v975 = vmul.f32 %v951, %v967
    %v976 = vmul.f32 %v952, %v968
    %v977 = vmul.f32 %v953, %v969
    %v978 = vmul.f32 %v954, %v970
    %v979 = vmul.f32 %v908, %v971
    %v980 = vmul.f32 %v910, %v972
    %v981 = vmul.f32 %v912, %v973
    %v982 = vmul.f32 %v914, %v974
    %v983 = vmul.f32 %v916, %v975
    %v984 = vmul.f32 %v918, %v976
    %v985 = vmul.f32 %v920, %v977
    %v986 = vmul.f32 %v922, %v978
    %987 = vrot.lane.b32.xlu0 %v192, 64
    %v988 = vpop.permute.xlu0 %987
    %v991 = vsel %vm216, %v979, 0
    %993 = vmatprep.subr.mxu0 0.0
    %994 = vmatpush1.msra.mxu0 %v988
    %995 = vmatprep.subr.mxu0 0.0
    %996 = vmatpush1.msra.mxu0 0.0
    %997 = vmatprep.subr.mxu0 0.0
    %998 = vmatpush1.msra.mxu0 0.0
    %999 = vmatprep.subr.mxu0 0.0
    %1000 = vmatpush1.msra.mxu0 0.0
    %1001 = vmatprep.subr.mxu0 0.0
    %1002 = vmatpush1.msra.mxu0 0.0
    %1003 = vmatprep.subr.mxu0 0.0
    %1004 = vmatpush1.msra.mxu0 0.0
    %1005 = vmatprep.subr.mxu0 0.0
    %1006 = vmatpush1.msra.mxu0 0.0
    %1007 = vmatprep.subr.mxu0 0.0
    %1008 = vmatpush1.msra.mxu0 0.0
    %1009 = vmatprep.subr.mxu0 0.0
    %1010 = vmatpush1.msra.mxu0 0.0
    %1011 = vmatprep.subr.mxu0 0.0
    %1012 = vmatpush1.msra.mxu0 0.0
    %1013 = vmatprep.subr.mxu0 0.0
    %1014 = vmatpush1.msra.mxu0 0.0
    %1015 = vmatprep.subr.mxu0 0.0
    %1016 = vmatpush1.msra.mxu0 0.0
    %1017 = vmatprep.subr.mxu0 0.0
    %1018 = vmatpush1.msra.mxu0 0.0
    %1019 = vmatprep.subr.mxu0 0.0
    %1020 = vmatpush1.msra.mxu0 0.0
    %1021 = vmatprep.subr.mxu0 0.0
    %1022 = vmatpush1.msra.mxu0 0.0
    %1023 = vmatprep.subr.mxu0 0.0
    %1024 = vmatpush1.msra.mxu0 0.0
    %1025 = vmatprep.subr.mxu0 0.0
    %1026 = vmatpush1.msra.mxu0 0.0
    %1027 = vmatprep.subr.mxu0 0.0
    %1028 = vmatpush1.msra.mxu0 0.0
    %1029 = vmatprep.subr.mxu0 0.0
    %1030 = vmatpush1.msra.mxu0 0.0
    %1031 = vmatprep.subr.mxu0 0.0
    %1032 = vmatpush1.msra.mxu0 0.0
    %1033 = vmatprep.subr.mxu0 0.0
    %1034 = vmatpush1.msra.mxu0 0.0
    %1035 = vmatprep.subr.mxu0 0.0
    %1036 = vmatpush1.msra.mxu0 0.0
    %1037 = vmatprep.subr.mxu0 0.0
    %1038 = vmatpush1.msra.mxu0 0.0
    %1039 = vmatprep.subr.mxu0 0.0
    %1040 = vmatpush1.msra.mxu0 0.0
    %1041 = vmatprep.subr.mxu0 0.0
    %1042 = vmatpush1.msra.mxu0 0.0
    %1043 = vmatprep.subr.mxu0 0.0
    %1044 = vmatpush1.msra.mxu0 0.0
    %1045 = vmatprep.subr.mxu0 0.0
    %1046 = vmatpush1.msra.mxu0 0.0
    %1047 = vmatprep.subr.mxu0 0.0
    %1048 = vmatpush1.msra.mxu0 0.0
    %1049 = vmatprep.subr.mxu0 0.0
    %1050 = vmatpush1.msra.mxu0 0.0
    %1051 = vmatprep.subr.mxu0 0.0
    %1052 = vmatpush1.msra.mxu0 0.0
    %1053 = vmatprep.subr.mxu0 0.0
    %1054 = vmatpush1.msra.mxu0 0.0
    %1055 = vmatprep.subr.mxu0 0.0
    %1056 = vmatpush1.msra.mxu0 0.0
    %1057 = vmatprep.mubr.f32.mxu0 0.0
    %1058 = vmatmul.mubr.f32.gmra.mrb[0].mxu0 %v991
    %v1059 = vpop.f32.mrb[0].mxu0
    %v1060 = vadd.f32 0.0, %v1059
    %v1061 = vpop.f32.mrb[0].mxu0
    %1062 = vdwg.mxu0
    %1063 = vrot.lane.b32.xlu0 %v197, 64
    %v1064 = vpop.permute.xlu0 %1063
    %v1067 = vsel %vm216, %v980, 0
    %1069 = vmatprep.subr.mxu0 0.0
    %1070 = vmatpush1.msra.mxu0 %v1064
    %1071 = vmatprep.subr.mxu0 0.0
    %1072 = vmatpush1.msra.mxu0 0.0
    %1073 = vmatprep.subr.mxu0 0.0
    %1074 = vmatpush1.msra.mxu0 0.0
    %1075 = vmatprep.subr.mxu0 0.0
    %1076 = vmatpush1.msra.mxu0 0.0
    %1077 = vmatprep.subr.mxu0 0.0
    %1078 = vmatpush1.msra.mxu0 0.0
    %1079 = vmatprep.subr.mxu0 0.0
    %1080 = vmatpush1.msra.mxu0 0.0
    %1081 = vmatprep.subr.mxu0 0.0
    %1082 = vmatpush1.msra.mxu0 0.0
    %1083 = vmatprep.subr.mxu0 0.0
    %1084 = vmatpush1.msra.mxu0 0.0
    %1085 = vmatprep.subr.mxu0 0.0
    %1086 = vmatpush1.msra.mxu0 0.0
    %1087 = vmatprep.subr.mxu0 0.0
    %1088 = vmatpush1.msra.mxu0 0.0
    %1089 = vmatprep.subr.mxu0 0.0
    %1090 = vmatpush1.msra.mxu0 0.0
    %1091 = vmatprep.subr.mxu0 0.0
    %1092 = vmatpush1.msra.mxu0 0.0
    %1093 = vmatprep.subr.mxu0 0.0
    %1094 = vmatpush1.msra.mxu0 0.0
    %1095 = vmatprep.subr.mxu0 0.0
    %1096 = vmatpush1.msra.mxu0 0.0
    %1097 = vmatprep.subr.mxu0 0.0
    %1098 = vmatpush1.msra.mxu0 0.0
    %1099 = vmatprep.subr.mxu0 0.0
    %1100 = vmatpush1.msra.mxu0 0.0
    %1101 = vmatprep.subr.mxu0 0.0
    %1102 = vmatpush1.msra.mxu0 0.0
    %1103 = vmatprep.subr.mxu0 0.0
    %1104 = vmatpush1.msra.mxu0 0.0
    %1105 = vmatprep.subr.mxu0 0.0
    %1106 = vmatpush1.msra.mxu0 0.0
    %1107 = vmatprep.subr.mxu0 0.0
    %1108 = vmatpush1.msra.mxu0 0.0
    %1109 = vmatprep.subr.mxu0 0.0
    %1110 = vmatpush1.msra.mxu0 0.0
    %1111 = vmatprep.subr.mxu0 0.0
    %1112 = vmatpush1.msra.mxu0 0.0
    %1113 = vmatprep.subr.mxu0 0.0
    %1114 = vmatpush1.msra.mxu0 0.0
    %1115 = vmatprep.subr.mxu0 0.0
    %1116 = vmatpush1.msra.mxu0 0.0
    %1117 = vmatprep.subr.mxu0 0.0
    %1118 = vmatpush1.msra.mxu0 0.0
    %1119 = vmatprep.subr.mxu0 0.0
    %1120 = vmatpush1.msra.mxu0 0.0
    %1121 = vmatprep.subr.mxu0 0.0
    %1122 = vmatpush1.msra.mxu0 0.0
    %1123 = vmatprep.subr.mxu0 0.0
    %1124 = vmatpush1.msra.mxu0 0.0
    %1125 = vmatprep.subr.mxu0 0.0
    %1126 = vmatpush1.msra.mxu0 0.0
    %1127 = vmatprep.subr.mxu0 0.0
    %1128 = vmatpush1.msra.mxu0 0.0
    %1129 = vmatprep.subr.mxu0 0.0
    %1130 = vmatpush1.msra.mxu0 0.0
    %1131 = vmatprep.subr.mxu0 0.0
    %1132 = vmatpush1.msra.mxu0 0.0
    %1133 = vmatprep.mubr.f32.mxu0 0.0
    %1134 = vmatmul.mubr.f32.gmra.mrb[0].mxu0 %v1067
    %v1135 = vpop.f32.mrb[0].mxu0
    %v1136 = vadd.f32 0.0, %v1135
    %v1137 = vpop.f32.mrb[0].mxu0
    %1138 = vdwg.mxu0
    %1139 = vrot.lane.b32.xlu0 %v203, 64
    %v1140 = vpop.permute.xlu0 %1139
    %v1143 = vsel %vm216, %v981, 0
    %1145 = vmatprep.subr.mxu0 0.0
    %1146 = vmatpush1.msra.mxu0 %v1140
    %1147 = vmatprep.subr.mxu0 0.0
    %1148 = vmatpush1.msra.mxu0 0.0
    %1149 = vmatprep.subr.mxu0 0.0
    %1150 = vmatpush1.msra.mxu0 0.0
    %1151 = vmatprep.subr.mxu0 0.0
    %1152 = vmatpush1.msra.mxu0 0.0
    %1153 = vmatprep.subr.mxu0 0.0
    %1154 = vmatpush1.msra.mxu0 0.0
    %1155 = vmatprep.subr.mxu0 0.0
    %1156 = vmatpush1.msra.mxu0 0.0
    %1157 = vmatprep.subr.mxu0 0.0
    %1158 = vmatpush1.msra.mxu0 0.0
    %1159 = vmatprep.subr.mxu0 0.0
    %1160 = vmatpush1.msra.mxu0 0.0
    %1161 = vmatprep.subr.mxu0 0.0
    %1162 = vmatpush1.msra.mxu0 0.0
    %1163 = vmatprep.subr.mxu0 0.0
    %1164 = vmatpush1.msra.mxu0 0.0
    %1165 = vmatprep.subr.mxu0 0.0
    %1166 = vmatpush1.msra.mxu0 0.0
    %1167 = vmatprep.subr.mxu0 0.0
    %1168 = vmatpush1.msra.mxu0 0.0
    %1169 = vmatprep.subr.mxu0 0.0
    %1170 = vmatpush1.msra.mxu0 0.0
    %1171 = vmatprep.subr.mxu0 0.0
    %1172 = vmatpush1.msra.mxu0 0.0
    %1173 = vmatprep.subr.mxu0 0.0
    %1174 = vmatpush1.msra.mxu0 0.0
    %1175 = vmatprep.subr.mxu0 0.0
    %1176 = vmatpush1.msra.mxu0 0.0
    %1177 = vmatprep.subr.mxu0 0.0
    %1178 = vmatpush1.msra.mxu0 0.0
    %1179 = vmatprep.subr.mxu0 0.0
    %1180 = vmatpush1.msra.mxu0 0.0
    %1181 = vmatprep.subr.mxu0 0.0
    %1182 = vmatpush1.msra.mxu0 0.0
    %1183 = vmatprep.subr.mxu0 0.0
    %1184 = vmatpush1.msra.mxu0 0.0
    %1185 = vmatprep.subr.mxu0 0.0
    %1186 = vmatpush1.msra.mxu0 0.0
    %1187 = vmatprep.subr.mxu0 0.0
    %1188 = vmatpush1.msra.mxu0 0.0
    %1189 = vmatprep.subr.mxu0 0.0
    %1190 = vmatpush1.msra.mxu0 0.0
    %1191 = vmatprep.subr.mxu0 0.0
    %1192 = vmatpush1.msra.mxu0 0.0
    %1193 = vmatprep.subr.mxu0 0.0
    %1194 = vmatpush1.msra.mxu0 0.0
    %1195 = vmatprep.subr.mxu0 0.0
    %1196 = vmatpush1.msra.mxu0 0.0
    %1197 = vmatprep.subr.mxu0 0.0
    %1198 = vmatpush1.msra.mxu0 0.0
    %1199 = vmatprep.subr.mxu0 0.0
    %1200 = vmatpush1.msra.mxu0 0.0
    %1201 = vmatprep.subr.mxu0 0.0
    %1202 = vmatpush1.msra.mxu0 0.0
    %1203 = vmatprep.subr.mxu0 0.0
    %1204 = vmatpush1.msra.mxu0 0.0
    %1205 = vmatprep.subr.mxu0 0.0
    %1206 = vmatpush1.msra.mxu0 0.0
    %1207 = vmatprep.subr.mxu0 0.0
    %1208 = vmatpush1.msra.mxu0 0.0
    %1209 = vmatprep.mubr.f32.mxu0 0.0
    %1210 = vmatmul.mubr.f32.gmra.mrb[0].mxu0 %v1143
    %v1211 = vpop.f32.mrb[0].mxu0
    %v1212 = vadd.f32 0.0, %v1211
    %v1213 = vpop.f32.mrb[0].mxu0
    %1214 = vdwg.mxu0
    %1215 = vrot.lane.b32.xlu0 %v205, 64
    %v1216 = vpop.permute.xlu0 %1215
    %v1219 = vsel %vm216, %v982, 0
    %1221 = vmatprep.subr.mxu0 0.0
    %1222 = vmatpush1.msra.mxu0 %v1216
    %1223 = vmatprep.subr.mxu0 0.0
    %1224 = vmatpush1.msra.mxu0 0.0
    %1225 = vmatprep.subr.mxu0 0.0
    %1226 = vmatpush1.msra.mxu0 0.0
    %1227 = vmatprep.subr.mxu0 0.0
    %1228 = vmatpush1.msra.mxu0 0.0
    %1229 = vmatprep.subr.mxu0 0.0
    %1230 = vmatpush1.msra.mxu0 0.0
    %1231 = vmatprep.subr.mxu0 0.0
    %1232 = vmatpush1.msra.mxu0 0.0
    %1233 = vmatprep.subr.mxu0 0.0
    %1234 = vmatpush1.msra.mxu0 0.0
    %1235 = vmatprep.subr.mxu0 0.0
    %1236 = vmatpush1.msra.mxu0 0.0
    %1237 = vmatprep.subr.mxu0 0.0
    %1238 = vmatpush1.msra.mxu0 0.0
    %1239 = vmatprep.subr.mxu0 0.0
    %1240 = vmatpush1.msra.mxu0 0.0
    %1241 = vmatprep.subr.mxu0 0.0
    %1242 = vmatpush1.msra.mxu0 0.0
    %1243 = vmatprep.subr.mxu0 0.0
    %1244 = vmatpush1.msra.mxu0 0.0
    %1245 = vmatprep.subr.mxu0 0.0
    %1246 = vmatpush1.msra.mxu0 0.0
    %1247 = vmatprep.subr.mxu0 0.0
    %1248 = vmatpush1.msra.mxu0 0.0
    %1249 = vmatprep.subr.mxu0 0.0
    %1250 = vmatpush1.msra.mxu0 0.0
    %1251 = vmatprep.subr.mxu0 0.0
    %1252 = vmatpush1.msra.mxu0 0.0
    %1253 = vmatprep.subr.mxu0 0.0
    %1254 = vmatpush1.msra.mxu0 0.0
    %1255 = vmatprep.subr.mxu0 0.0
    %1256 = vmatpush1.msra.mxu0 0.0
    %1257 = vmatprep.subr.mxu0 0.0
    %1258 = vmatpush1.msra.mxu0 0.0
    %1259 = vmatprep.subr.mxu0 0.0
    %1260 = vmatpush1.msra.mxu0 0.0
    %1261 = vmatprep.subr.mxu0 0.0
    %1262 = vmatpush1.msra.mxu0 0.0
    %1263 = vmatprep.subr.mxu0 0.0
    %1264 = vmatpush1.msra.mxu0 0.0
    %1265 = vmatprep.subr.mxu0 0.0
    %1266 = vmatpush1.msra.mxu0 0.0
    %1267 = vmatprep.subr.mxu0 0.0
    %1268 = vmatpush1.msra.mxu0 0.0
    %1269 = vmatprep.subr.mxu0 0.0
    %1270 = vmatpush1.msra.mxu0 0.0
    %1271 = vmatprep.subr.mxu0 0.0
    %1272 = vmatpush1.msra.mxu0 0.0
    %1273 = vmatprep.subr.mxu0 0.0
    %1274 = vmatpush1.msra.mxu0 0.0
    %1275 = vmatprep.subr.mxu0 0.0
    %1276 = vmatpush1.msra.mxu0 0.0
    %1277 = vmatprep.subr.mxu0 0.0
    %1278 = vmatpush1.msra.mxu0 0.0
    %1279 = vmatprep.subr.mxu0 0.0
    %1280 = vmatpush1.msra.mxu0 0.0
    %1281 = vmatprep.subr.mxu0 0.0
    %1282 = vmatpush1.msra.mxu0 0.0
    %1283 = vmatprep.subr.mxu0 0.0
    %1284 = vmatpush1.msra.mxu0 0.0
    %1285 = vmatprep.mubr.f32.mxu0 0.0
    %1286 = vmatmul.mubr.f32.gmra.mrb[0].mxu0 %v1219
    %v1287 = vpop.f32.mrb[0].mxu0
    %v1288 = vadd.f32 0.0, %v1287
    %v1289 = vpop.f32.mrb[0].mxu0
    %1290 = vdwg.mxu0
    %1291 = vrot.lane.b32.xlu0 %v207, 64
    %v1292 = vpop.permute.xlu0 %1291
    %v1295 = vsel %vm216, %v983, 0
    %1297 = vmatprep.subr.mxu0 0.0
    %1298 = vmatpush1.msra.mxu0 %v1292
    %1299 = vmatprep.subr.mxu0 0.0
    %1300 = vmatpush1.msra.mxu0 0.0
    %1301 = vmatprep.subr.mxu0 0.0
    %1302 = vmatpush1.msra.mxu0 0.0
    %1303 = vmatprep.subr.mxu0 0.0
    %1304 = vmatpush1.msra.mxu0 0.0
    %1305 = vmatprep.subr.mxu0 0.0
    %1306 = vmatpush1.msra.mxu0 0.0
    %1307 = vmatprep.subr.mxu0 0.0
    %1308 = vmatpush1.msra.mxu0 0.0
    %1309 = vmatprep.subr.mxu0 0.0
    %1310 = vmatpush1.msra.mxu0 0.0
    %1311 = vmatprep.subr.mxu0 0.0
    %1312 = vmatpush1.msra.mxu0 0.0
    %1313 = vmatprep.subr.mxu0 0.0
    %1314 = vmatpush1.msra.mxu0 0.0
    %1315 = vmatprep.subr.mxu0 0.0
    %1316 = vmatpush1.msra.mxu0 0.0
    %1317 = vmatprep.subr.mxu0 0.0
    %1318 = vmatpush1.msra.mxu0 0.0
    %1319 = vmatprep.subr.mxu0 0.0
    %1320 = vmatpush1.msra.mxu0 0.0
    %1321 = vmatprep.subr.mxu0 0.0
    %1322 = vmatpush1.msra.mxu0 0.0
    %1323 = vmatprep.subr.mxu0 0.0
    %1324 = vmatpush1.msra.mxu0 0.0
    %1325 = vmatprep.subr.mxu0 0.0
    %1326 = vmatpush1.msra.mxu0 0.0
    %1327 = vmatprep.subr.mxu0 0.0
    %1328 = vmatpush1.msra.mxu0 0.0
    %1329 = vmatprep.subr.mxu0 0.0
    %1330 = vmatpush1.msra.mxu0 0.0
    %1331 = vmatprep.subr.mxu0 0.0
    %1332 = vmatpush1.msra.mxu0 0.0
    %1333 = vmatprep.subr.mxu0 0.0
    %1334 = vmatpush1.msra.mxu0 0.0
    %1335 = vmatprep.subr.mxu0 0.0
    %1336 = vmatpush1.msra.mxu0 0.0
    %1337 = vmatprep.subr.mxu0 0.0
    %1338 = vmatpush1.msra.mxu0 0.0
    %1339 = vmatprep.subr.mxu0 0.0
    %1340 = vmatpush1.msra.mxu0 0.0
    %1341 = vmatprep.subr.mxu0 0.0
    %1342 = vmatpush1.msra.mxu0 0.0
    %1343 = vmatprep.subr.mxu0 0.0
    %1344 = vmatpush1.msra.mxu0 0.0
    %1345 = vmatprep.subr.mxu0 0.0
    %1346 = vmatpush1.msra.mxu0 0.0
    %1347 = vmatprep.subr.mxu0 0.0
    %1348 = vmatpush1.msra.mxu0 0.0
    %1349 = vmatprep.subr.mxu0 0.0
    %1350 = vmatpush1.msra.mxu0 0.0
    %1351 = vmatprep.subr.mxu0 0.0
    %1352 = vmatpush1.msra.mxu0 0.0
    %1353 = vmatprep.subr.mxu0 0.0
    %1354 = vmatpush1.msra.mxu0 0.0
    %1355 = vmatprep.subr.mxu0 0.0
    %1356 = vmatpush1.msra.mxu0 0.0
    %1357 = vmatprep.subr.mxu0 0.0
    %1358 = vmatpush1.msra.mxu0 0.0
    %1359 = vmatprep.subr.mxu0 0.0
    %1360 = vmatpush1.msra.mxu0 0.0
    %1361 = vmatprep.mubr.f32.mxu0 0.0
    %1362 = vmatmul.mubr.f32.gmra.mrb[0].mxu0 %v1295
    %v1363 = vpop.f32.mrb[0].mxu0
    %v1364 = vadd.f32 0.0, %v1363
    %v1365 = vpop.f32.mrb[0].mxu0
    %1366 = vdwg.mxu0
    %1367 = vrot.lane.b32.xlu0 %v209, 64
    %v1368 = vpop.permute.xlu0 %1367
    %v1371 = vsel %vm216, %v984, 0
    %1373 = vmatprep.subr.mxu0 0.0
    %1374 = vmatpush1.msra.mxu0 %v1368
    %1375 = vmatprep.subr.mxu0 0.0
    %1376 = vmatpush1.msra.mxu0 0.0
    %1377 = vmatprep.subr.mxu0 0.0
    %1378 = vmatpush1.msra.mxu0 0.0
    %1379 = vmatprep.subr.mxu0 0.0
    %1380 = vmatpush1.msra.mxu0 0.0
    %1381 = vmatprep.subr.mxu0 0.0
    %1382 = vmatpush1.msra.mxu0 0.0
    %1383 = vmatprep.subr.mxu0 0.0
    %1384 = vmatpush1.msra.mxu0 0.0
    %1385 = vmatprep.subr.mxu0 0.0
    %1386 = vmatpush1.msra.mxu0 0.0
    %1387 = vmatprep.subr.mxu0 0.0
    %1388 = vmatpush1.msra.mxu0 0.0
    %1389 = vmatprep.subr.mxu0 0.0
    %1390 = vmatpush1.msra.mxu0 0.0
    %1391 = vmatprep.subr.mxu0 0.0
    %1392 = vmatpush1.msra.mxu0 0.0
    %1393 = vmatprep.subr.mxu0 0.0
    %1394 = vmatpush1.msra.mxu0 0.0
    %1395 = vmatprep.subr.mxu0 0.0
    %1396 = vmatpush1.msra.mxu0 0.0
    %1397 = vmatprep.subr.mxu0 0.0
    %1398 = vmatpush1.msra.mxu0 0.0
    %1399 = vmatprep.subr.mxu0 0.0
    %1400 = vmatpush1.msra.mxu0 0.0
    %1401 = vmatprep.subr.mxu0 0.0
    %1402 = vmatpush1.msra.mxu0 0.0
    %1403 = vmatprep.subr.mxu0 0.0
    %1404 = vmatpush1.msra.mxu0 0.0
    %1405 = vmatprep.subr.mxu0 0.0
    %1406 = vmatpush1.msra.mxu0 0.0
    %1407 = vmatprep.subr.mxu0 0.0
    %1408 = vmatpush1.msra.mxu0 0.0
    %1409 = vmatprep.subr.mxu0 0.0
    %1410 = vmatpush1.msra.mxu0 0.0
    %1411 = vmatprep.subr.mxu0 0.0
    %1412 = vmatpush1.msra.mxu0 0.0
    %1413 = vmatprep.subr.mxu0 0.0
    %1414 = vmatpush1.msra.mxu0 0.0
    %1415 = vmatprep.subr.mxu0 0.0
    %1416 = vmatpush1.msra.mxu0 0.0
    %1417 = vmatprep.subr.mxu0 0.0
    %1418 = vmatpush1.msra.mxu0 0.0
    %1419 = vmatprep.subr.mxu0 0.0
    %1420 = vmatpush1.msra.mxu0 0.0
    %1421 = vmatprep.subr.mxu0 0.0
    %1422 = vmatpush1.msra.mxu0 0.0
    %1423 = vmatprep.subr.mxu0 0.0
    %1424 = vmatpush1.msra.mxu0 0.0
    %1425 = vmatprep.subr.mxu0 0.0
    %1426 = vmatpush1.msra.mxu0 0.0
    %1427 = vmatprep.subr.mxu0 0.0
    %1428 = vmatpush1.msra.mxu0 0.0
    %1429 = vmatprep.subr.mxu0 0.0
    %1430 = vmatpush1.msra.mxu0 0.0
    %1431 = vmatprep.subr.mxu0 0.0
    %1432 = vmatpush1.msra.mxu0 0.0
    %1433 = vmatprep.subr.mxu0 0.0
    %1434 = vmatpush1.msra.mxu0 0.0
    %1435 = vmatprep.subr.mxu0 0.0
    %1436 = vmatpush1.msra.mxu0 0.0
    %1437 = vmatprep.mubr.f32.mxu0 0.0
    %1438 = vmatmul.mubr.f32.gmra.mrb[0].mxu0 %v1371
    %v1439 = vpop.f32.mrb[0].mxu0
    %v1440 = vadd.f32 0.0, %v1439
    %v1441 = vpop.f32.mrb[0].mxu0
    %1442 = vdwg.mxu0
    %1443 = vrot.lane.b32.xlu0 %v211, 64
    %v1444 = vpop.permute.xlu0 %1443
    %v1447 = vsel %vm216, %v985, 0
    %1449 = vmatprep.subr.mxu0 0.0
    %1450 = vmatpush1.msra.mxu0 %v1444
    %1451 = vmatprep.subr.mxu0 0.0
    %1452 = vmatpush1.msra.mxu0 0.0
    %1453 = vmatprep.subr.mxu0 0.0
    %1454 = vmatpush1.msra.mxu0 0.0
    %1455 = vmatprep.subr.mxu0 0.0
    %1456 = vmatpush1.msra.mxu0 0.0
    %1457 = vmatprep.subr.mxu0 0.0
    %1458 = vmatpush1.msra.mxu0 0.0
    %1459 = vmatprep.subr.mxu0 0.0
    %1460 = vmatpush1.msra.mxu0 0.0
    %1461 = vmatprep.subr.mxu0 0.0
    %1462 = vmatpush1.msra.mxu0 0.0
    %1463 = vmatprep.subr.mxu0 0.0
    %1464 = vmatpush1.msra.mxu0 0.0
    %1465 = vmatprep.subr.mxu0 0.0
    %1466 = vmatpush1.msra.mxu0 0.0
    %1467 = vmatprep.subr.mxu0 0.0
    %1468 = vmatpush1.msra.mxu0 0.0
    %1469 = vmatprep.subr.mxu0 0.0
    %1470 = vmatpush1.msra.mxu0 0.0
    %1471 = vmatprep.subr.mxu0 0.0
    %1472 = vmatpush1.msra.mxu0 0.0
    %1473 = vmatprep.subr.mxu0 0.0
    %1474 = vmatpush1.msra.mxu0 0.0
    %1475 = vmatprep.subr.mxu0 0.0
    %1476 = vmatpush1.msra.mxu0 0.0
    %1477 = vmatprep.subr.mxu0 0.0
    %1478 = vmatpush1.msra.mxu0 0.0
    %1479 = vmatprep.subr.mxu0 0.0
    %1480 = vmatpush1.msra.mxu0 0.0
    %1481 = vmatprep.subr.mxu0 0.0
    %1482 = vmatpush1.msra.mxu0 0.0
    %1483 = vmatprep.subr.mxu0 0.0
    %1484 = vmatpush1.msra.mxu0 0.0
    %1485 = vmatprep.subr.mxu0 0.0
    %1486 = vmatpush1.msra.mxu0 0.0
    %1487 = vmatprep.subr.mxu0 0.0
    %1488 = vmatpush1.msra.mxu0 0.0
    %1489 = vmatprep.subr.mxu0 0.0
    %1490 = vmatpush1.msra.mxu0 0.0
    %1491 = vmatprep.subr.mxu0 0.0
    %1492 = vmatpush1.msra.mxu0 0.0
    %1493 = vmatprep.subr.mxu0 0.0
    %1494 = vmatpush1.msra.mxu0 0.0
    %1495 = vmatprep.subr.mxu0 0.0
    %1496 = vmatpush1.msra.mxu0 0.0
    %1497 = vmatprep.subr.mxu0 0.0
    %1498 = vmatpush1.msra.mxu0 0.0
    %1499 = vmatprep.subr.mxu0 0.0
    %1500 = vmatpush1.msra.mxu0 0.0
    %1501 = vmatprep.subr.mxu0 0.0
    %1502 = vmatpush1.msra.mxu0 0.0
    %1503 = vmatprep.subr.mxu0 0.0
    %1504 = vmatpush1.msra.mxu0 0.0
    %1505 = vmatprep.subr.mxu0 0.0
    %1506 = vmatpush1.msra.mxu0 0.0
    %1507 = vmatprep.subr.mxu0 0.0
    %1508 = vmatpush1.msra.mxu0 0.0
    %1509 = vmatprep.subr.mxu0 0.0
    %1510 = vmatpush1.msra.mxu0 0.0
    %1511 = vmatprep.subr.mxu0 0.0
    %1512 = vmatpush1.msra.mxu0 0.0
    %1513 = vmatprep.mubr.f32.mxu0 0.0
    %1514 = vmatmul.mubr.f32.gmra.mrb[0].mxu0 %v1447
    %v1515 = vpop.f32.mrb[0].mxu0
    %v1516 = vadd.f32 0.0, %v1515
    %v1517 = vpop.f32.mrb[0].mxu0
    %1518 = vdwg.mxu0
    %1519 = vrot.lane.b32.xlu0 %v213, 64
    %v1520 = vpop.permute.xlu0 %1519
    %v1523 = vsel %vm216, %v986, 0
    %1525 = vmatprep.subr.mxu0 0.0
    %1526 = vmatpush1.msra.mxu0 %v1520
    %1527 = vmatprep.subr.mxu0 0.0
    %1528 = vmatpush1.msra.mxu0 0.0
    %1529 = vmatprep.subr.mxu0 0.0
    %1530 = vmatpush1.msra.mxu0 0.0
    %1531 = vmatprep.subr.mxu0 0.0
    %1532 = vmatpush1.msra.mxu0 0.0
    %1533 = vmatprep.subr.mxu0 0.0
    %1534 = vmatpush1.msra.mxu0 0.0
    %1535 = vmatprep.subr.mxu0 0.0
    %1536 = vmatpush1.msra.mxu0 0.0
    %1537 = vmatprep.subr.mxu0 0.0
    %1538 = vmatpush1.msra.mxu0 0.0
    %1539 = vmatprep.subr.mxu0 0.0
    %1540 = vmatpush1.msra.mxu0 0.0
    %1541 = vmatprep.subr.mxu0 0.0
    %1542 = vmatpush1.msra.mxu0 0.0
    %1543 = vmatprep.subr.mxu0 0.0
    %1544 = vmatpush1.msra.mxu0 0.0
    %1545 = vmatprep.subr.mxu0 0.0
    %1546 = vmatpush1.msra.mxu0 0.0
    %1547 = vmatprep.subr.mxu0 0.0
    %1548 = vmatpush1.msra.mxu0 0.0
    %1549 = vmatprep.subr.mxu0 0.0
    %1550 = vmatpush1.msra.mxu0 0.0
    %1551 = vmatprep.subr.mxu0 0.0
    %1552 = vmatpush1.msra.mxu0 0.0
    %1553 = vmatprep.subr.mxu0 0.0
    %1554 = vmatpush1.msra.mxu0 0.0
    %1555 = vmatprep.subr.mxu0 0.0
    %1556 = vmatpush1.msra.mxu0 0.0
    %1557 = vmatprep.subr.mxu0 0.0
    %1558 = vmatpush1.msra.mxu0 0.0
    %1559 = vmatprep.subr.mxu0 0.0
    %1560 = vmatpush1.msra.mxu0 0.0
    %1561 = vmatprep.subr.mxu0 0.0
    %1562 = vmatpush1.msra.mxu0 0.0
    %1563 = vmatprep.subr.mxu0 0.0
    %1564 = vmatpush1.msra.mxu0 0.0
    %1565 = vmatprep.subr.mxu0 0.0
    %1566 = vmatpush1.msra.mxu0 0.0
    %1567 = vmatprep.subr.mxu0 0.0
    %1568 = vmatpush1.msra.mxu0 0.0
    %1569 = vmatprep.subr.mxu0 0.0
    %1570 = vmatpush1.msra.mxu0 0.0
    %1571 = vmatprep.subr.mxu0 0.0
    %1572 = vmatpush1.msra.mxu0 0.0
    %1573 = vmatprep.subr.mxu0 0.0
    %1574 = vmatpush1.msra.mxu0 0.0
    %1575 = vmatprep.subr.mxu0 0.0
    %1576 = vmatpush1.msra.mxu0 0.0
    %1577 = vmatprep.subr.mxu0 0.0
    %1578 = vmatpush1.msra.mxu0 0.0
    %1579 = vmatprep.subr.mxu0 0.0
    %1580 = vmatpush1.msra.mxu0 0.0
    %1581 = vmatprep.subr.mxu0 0.0
    %1582 = vmatpush1.msra.mxu0 0.0
    %1583 = vmatprep.subr.mxu0 0.0
    %1584 = vmatpush1.msra.mxu0 0.0
    %1585 = vmatprep.subr.mxu0 0.0
    %1586 = vmatpush1.msra.mxu0 0.0
    %1587 = vmatprep.subr.mxu0 0.0
    %1588 = vmatpush1.msra.mxu0 0.0
    %1589 = vmatprep.mubr.f32.mxu0 0.0
    %1590 = vmatmul.mubr.f32.gmra.mrb[0].mxu0 %v1523
    %v1591 = vpop.f32.mrb[0].mxu0
    %v1592 = vadd.f32 0.0, %v1591
    %v1593 = vpop.f32.mrb[0].mxu0
    %1594 = vdwg.mxu0
    %1597 = vrot.lane.b32.xlu0 %v1212, 8
    %v1598 = vpop.permute.xlu0 %1597
    %1599 = vrot.lane.b32.xlu0 %v1288, 8
    %v1600 = vpop.permute.xlu0 %1599
    %1605 = vrot.lane.b32.xlu0 %v1364, 16
    %v1606 = vpop.permute.xlu0 %1605
    %1607 = vrot.lane.b32.xlu0 %v1440, 16
    %v1608 = vpop.permute.xlu0 %1607
    %1613 = vrot.lane.b32.xlu0 %v1516, 24
    %v1614 = vpop.permute.xlu0 %1613
    %1615 = vrot.lane.b32.xlu0 %v1592, 24
    %v1616 = vpop.permute.xlu0 %1615
    %v1619 = vsel %vm216, %v1060, %v1598
    %v1620 = vsel %vm216, %v1136, %v1600
    %vm1621 = vcmask 130048
    %v1622 = vsel %vm1621, %v1619, %v1606
    %v1623 = vsel %vm1621, %v1620, %v1608
    %vm1624 = vcmask 195584
    %v1625 = vsel %vm1624, %v1622, %v1614
    %v1626 = vsel %vm1624, %v1623, %v1616
    %v1627 = vld [vmem:[%s3] sm:$0xff]
    %v1628 = vld [vmem:[%s3 + $0x8] sm:$0xff]
    %v1629 = vld [vmem:[%s3 + $0x10] sm:$0xff]
    %v1630 = vld [vmem:[%s3 + $0x18] sm:$0xff]
    %v1631 = vlaneseq
    %v1632 = vshrl.u32 %v1631, 7
    %v1633 = vsub.s32 0, %v1632
    %v1634 = vrot.slane %v47, %v1633
    %v1636 = vsel %vm51, %v1625, 0
    %v1639 = vsel %vm51, %v1626, 0
    %1641 = vmatprep.subr.mxu0 0.0
    %1642 = vmatpush1.msra.mxu0 %v1627
    %1643 = vmatprep.subr.mxu0 0.0
    %1644 = vmatpush1.msra.mxu0 %v1628
    %1645 = vmatprep.subr.mxu0 0.0
    %1646 = vmatpush1.msra.mxu0 %v1629
    %1647 = vmatprep.subr.mxu0 0.0
    %1648 = vmatpush1.msra.mxu0 %v1630
    %1649 = vmatprep.subr.mxu0 0.0
    %1650 = vmatpush1.msra.mxu0 0.0
    %1651 = vmatprep.subr.mxu0 0.0
    %1652 = vmatpush1.msra.mxu0 0.0
    %1653 = vmatprep.subr.mxu0 0.0
    %1654 = vmatpush1.msra.mxu0 0.0
    %1655 = vmatprep.subr.mxu0 0.0
    %1656 = vmatpush1.msra.mxu0 0.0
    %1657 = vmatprep.subr.mxu0 0.0
    %1658 = vmatpush1.msra.mxu0 0.0
    %1659 = vmatprep.subr.mxu0 0.0
    %1660 = vmatpush1.msra.mxu0 0.0
    %1661 = vmatprep.subr.mxu0 0.0
    %1662 = vmatpush1.msra.mxu0 0.0
    %1663 = vmatprep.subr.mxu0 0.0
    %1664 = vmatpush1.msra.mxu0 0.0
    %1665 = vmatprep.subr.mxu0 0.0
    %1666 = vmatpush1.msra.mxu0 0.0
    %1667 = vmatprep.subr.mxu0 0.0
    %1668 = vmatpush1.msra.mxu0 0.0
    %1669 = vmatprep.subr.mxu0 0.0
    %1670 = vmatpush1.msra.mxu0 0.0
    %1671 = vmatprep.subr.mxu0 0.0
    %1672 = vmatpush1.msra.mxu0 0.0
    %1673 = vmatprep.subr.mxu0 0.0
    %1674 = vmatpush1.msra.mxu0 0.0
    %1675 = vmatprep.subr.mxu0 0.0
    %1676 = vmatpush1.msra.mxu0 0.0
    %1677 = vmatprep.subr.mxu0 0.0
    %1678 = vmatpush1.msra.mxu0 0.0
    %1679 = vmatprep.subr.mxu0 0.0
    %1680 = vmatpush1.msra.mxu0 0.0
    %1681 = vmatprep.subr.mxu0 0.0
    %1682 = vmatpush1.msra.mxu0 0.0
    %1683 = vmatprep.subr.mxu0 0.0
    %1684 = vmatpush1.msra.mxu0 0.0
    %1685 = vmatprep.subr.mxu0 0.0
    %1686 = vmatpush1.msra.mxu0 0.0
    %1687 = vmatprep.subr.mxu0 0.0
    %1688 = vmatpush1.msra.mxu0 0.0
    %1689 = vmatprep.subr.mxu0 0.0
    %1690 = vmatpush1.msra.mxu0 0.0
    %1691 = vmatprep.subr.mxu0 0.0
    %1692 = vmatpush1.msra.mxu0 0.0
    %1693 = vmatprep.subr.mxu0 0.0
    %1694 = vmatpush1.msra.mxu0 0.0
    %1695 = vmatprep.subr.mxu0 0.0
    %1696 = vmatpush1.msra.mxu0 0.0
    %1697 = vmatprep.subr.mxu0 0.0
    %1698 = vmatpush1.msra.mxu0 0.0
    %1699 = vmatprep.subr.mxu0 0.0
    %1700 = vmatpush1.msra.mxu0 0.0
    %1701 = vmatprep.subr.mxu0 0.0
    %1702 = vmatpush1.msra.mxu0 0.0
    %1703 = vmatprep.subr.mxu0 0.0
    %1704 = vmatpush1.msra.mxu0 0.0
    %1705 = vmatprep.mubr.f32.mxu0 0.0
    %1706 = vmatmul.mubr.f32.gmra.mrb[0].mxu0 %v1636
    %v1707 = vpop.f32.mrb[0].mxu0
    %v1708 = vadd.f32 %v1634, %v1707
    %v1709 = vpop.f32.mrb[0].mxu0
    %1710 = vmatprep.mubr.f32.mxu0 0.0
    %1711 = vmatmul.mubr.f32.gmra.mrb[0].mxu0 %v1639
    %v1712 = vpop.f32.mrb[0].mxu0
    %v1713 = vadd.f32 %v1634, %v1712
    %v1714 = vpop.f32.mrb[0].mxu0
    %1715 = vdwg.mxu0
    %v1716 = vadd.f32 %v41, %v1708
    %v1717 = vadd.f32 %v42, %v1713
    %v1718 = vsel %vm51, %v1716, 0.0
    %1719 = vadd.xlane.f32.xlu0 %v1718
    %v1720 = vpop.xlane.xlu0 %1719
    %v1721 = vsel %vm51, %v1717, 0.0
    %1722 = vadd.xlane.f32.xlu0 %v1721
    %v1723 = vpop.xlane.xlu0 %1722
    %v1724 = vmul.f32 %v1720, %v58
    %v1725 = vmul.f32 %v1723, %v58
    %v1726 = vsub.f32 %v1716, %v1724
    %v1727 = vsub.f32 %v1717, %v1725
    %v1728 = vmul.f32 %v1726, %v1726
    %v1729 = vmul.f32 %v1727, %v1727
    %v1730 = vsel %vm51, %v1728, 0.0
    %1731 = vadd.xlane.f32.xlu0 %v1730
    %v1732 = vpop.xlane.xlu0 %1731
    %v1733 = vsel %vm51, %v1729, 0.0
    %1734 = vadd.xlane.f32.xlu0 %v1733
    %v1735 = vpop.xlane.xlu0 %1734
    %v1736 = vmul.f32 %v1732, 0.032258064
    %v1737 = vmul.f32 %v1735, 0.032258064
    %v1738 = vrsqrt.pop %v1736
    %v1739 = vmul.f32 %v1736, %v1738
    %vm1740 = vcmp.eq.f32.partialorder %v1736, inf
    %v1741 = vsel %vm1740, %v1736, %v1739
    %vm1742 = vcmp.eq.f32.partialorder %v1736, 0.0
    %v1743 = vand.u32 %v1736, 2147483648
    %v1744 = vsel %vm1742, %v1743, %v1741
    %v1745 = vrsqrt.pop %v1737
    %v1746 = vmul.f32 %v1737, %v1745
    %vm1747 = vcmp.eq.f32.partialorder %v1737, inf
    %v1748 = vsel %vm1747, %v1737, %v1746
    %vm1749 = vcmp.eq.f32.partialorder %v1737, 0.0
    %v1750 = vand.u32 %v1737, 2147483648
    %v1751 = vsel %vm1749, %v1750, %v1748
    %v1752 = vadd.f32 %v1744, 1e-06
    %v1753 = vadd.f32 %v1751, 1e-06
    %v1754 = vrcp.pop %v1752
    %v1755 = vrcp.pop %v1753
    %v1756 = vmul.f32 %v1752, %v1754
    %v1757 = vmul.f32 %v1753, %v1755
    %v1758 = vsub.f32 2.0, %v1756
    %v1759 = vsub.f32 2.0, %v1757
    %v1760 = vmul.f32 %v1754, %v1758
    %v1761 = vmul.f32 %v1755, %v1759
    %v1762 = vlaneseq
    %v1763 = vshrl.u32 %v1762, 7
    %v1764 = vsub.s32 0, %v1763
    %v1765 = vrot.slane %v45, %v1764
    %v1766 = vmul.f32 %v1765, %v1726
    %v1767 = vmul.f32 %v1765, %v1727
    %v1768 = vmul.f32 %v1766, %v1760
    %v1769 = vmul.f32 %v1767, %v1761
    %v1770 = vlaneseq
    %v1771 = vshrl.u32 %v1770, 7
    %v1772 = vsub.s32 0, %v1771
    %v1773 = vrot.slane %v46, %v1772
    %v1774 = vadd.f32 %v1768, %v1773
    %v1775 = vadd.f32 %v1769, %v1773
    %v1776 = vld [vmem:[%s4] sm:$0xff]
    %v1777 = vld [vmem:[%s4 + $0x8] sm:$0xff]
    %v1778 = vld [vmem:[%s4 + $0x10] sm:$0xff]
    %v1779 = vld [vmem:[%s4 + $0x18] sm:$0xff]
    %v1780 = vlaneseq
    %v1781 = vshrl.u32 %v1780, 7
    %v1782 = vsub.s32 0, %v1781
    %v1783 = vrot.slane %v50, %v1782
    %v1785 = vsel %vm51, %v1774, 0
    %v1788 = vsel %vm51, %v1775, 0
    %1790 = vmatprep.subr.mxu0 0.0
    %1791 = vmatpush1.msra.mxu0 %v1776
    %1792 = vmatprep.subr.mxu0 0.0
    %1793 = vmatpush1.msra.mxu0 %v1777
    %1794 = vmatprep.subr.mxu0 0.0
    %1795 = vmatpush1.msra.mxu0 %v1778
    %1796 = vmatprep.subr.mxu0 0.0
    %1797 = vmatpush1.msra.mxu0 %v1779
    %1798 = vmatprep.subr.mxu0 0.0
    %1799 = vmatpush1.msra.mxu0 0.0
    %1800 = vmatprep.subr.mxu0 0.0
    %1801 = vmatpush1.msra.mxu0 0.0
    %1802 = vmatprep.subr.mxu0 0.0
    %1803 = vmatpush1.msra.mxu0 0.0
    %1804 = vmatprep.subr.mxu0 0.0
    %1805 = vmatpush1.msra.mxu0 0.0
    %1806 = vmatprep.subr.mxu0 0.0
    %1807 = vmatpush1.msra.mxu0 0.0
    %1808 = vmatprep.subr.mxu0 0.0
    %1809 = vmatpush1.msra.mxu0 0.0
    %1810 = vmatprep.subr.mxu0 0.0
    %1811 = vmatpush1.msra.mxu0 0.0
    %1812 = vmatprep.subr.mxu0 0.0
    %1813 = vmatpush1.msra.mxu0 0.0
    %1814 = vmatprep.subr.mxu0 0.0
    %1815 = vmatpush1.msra.mxu0 0.0
    %1816 = vmatprep.subr.mxu0 0.0
    %1817 = vmatpush1.msra.mxu0 0.0
    %1818 = vmatprep.subr.mxu0 0.0
    %1819 = vmatpush1.msra.mxu0 0.0
    %1820 = vmatprep.subr.mxu0 0.0
    %1821 = vmatpush1.msra.mxu0 0.0
    %1822 = vmatprep.subr.mxu0 0.0
    %1823 = vmatpush1.msra.mxu0 0.0
    %1824 = vmatprep.subr.mxu0 0.0
    %1825 = vmatpush1.msra.mxu0 0.0
    %1826 = vmatprep.subr.mxu0 0.0
    %1827 = vmatpush1.msra.mxu0 0.0
    %1828 = vmatprep.subr.mxu0 0.0
    %1829 = vmatpush1.msra.mxu0 0.0
    %1830 = vmatprep.subr.mxu0 0.0
    %1831 = vmatpush1.msra.mxu0 0.0
    %1832 = vmatprep.subr.mxu0 0.0
    %1833 = vmatpush1.msra.mxu0 0.0
    %1834 = vmatprep.subr.mxu0 0.0
    %1835 = vmatpush1.msra.mxu0 0.0
    %1836 = vmatprep.subr.mxu0 0.0
    %1837 = vmatpush1.msra.mxu0 0.0
    %1838 = vmatprep.subr.mxu0 0.0
    %1839 = vmatpush1.msra.mxu0 0.0
    %1840 = vmatprep.subr.mxu0 0.0
    %1841 = vmatpush1.msra.mxu0 0.0
    %1842 = vmatprep.subr.mxu0 0.0
    %1843 = vmatpush1.msra.mxu0 0.0
    %1844 = vmatprep.subr.mxu0 0.0
    %1845 = vmatpush1.msra.mxu0 0.0
    %1846 = vmatprep.subr.mxu0 0.0
    %1847 = vmatpush1.msra.mxu0 0.0
    %1848 = vmatprep.subr.mxu0 0.0
    %1849 = vmatpush1.msra.mxu0 0.0
    %1850 = vmatprep.subr.mxu0 0.0
    %1851 = vmatpush1.msra.mxu0 0.0
    %1852 = vmatprep.subr.mxu0 0.0
    %1853 = vmatpush1.msra.mxu0 0.0
    %1854 = vmatprep.mubr.f32.mxu0 0.0
    %1855 = vmatmul.mubr.f32.gmra.mrb[0].mxu0 %v1785
    %v1856 = vpop.f32.mrb[0].mxu0
    %v1857 = vadd.f32 %v1783, %v1856
    %v1858 = vpop.f32.mrb[0].mxu0
    %1859 = vmatprep.mubr.f32.mxu0 0.0
    %1860 = vmatmul.mubr.f32.gmra.mrb[0].mxu0 %v1788
    %v1861 = vpop.f32.mrb[0].mxu0
    %v1862 = vadd.f32 %v1783, %v1861
    %v1863 = vpop.f32.mrb[0].mxu0
    %1864 = vdwg.mxu0
    %v1865 = vmax.f32 %v1857, 0.0
    %v1866 = vmax.f32 %v1862, 0.0
    %v1867 = vld [vmem:[%s5] sm:$0xff]
    %v1868 = vld [vmem:[%s5 + $0x8] sm:$0xff]
    %v1869 = vld [vmem:[%s5 + $0x10] sm:$0xff]
    %v1870 = vld [vmem:[%s5 + $0x18] sm:$0xff]
    %v1871 = vld [vmem:[%s5 + $0x20] sm:$0xff]
    %v1872 = vld [vmem:[%s5 + $0x28] sm:$0xff]
    %v1873 = vld [vmem:[%s5 + $0x30] sm:$0xff]
    %v1874 = vld [vmem:[%s5 + $0x38] sm:$0xff]
    %v1875 = vlaneseq
    %v1876 = vshrl.u32 %v1875, 7
    %v1877 = vsub.s32 0, %v1876
    %v1878 = vrot.slane %v48, %v1877
    %vm1879 = vcmask 523264
    %v1881 = vsel %vm1879, %v1865, 0
    %v1884 = vsel %vm1879, %v1866, 0
    %1886 = vmatprep.subr.mxu0 0.0
    %1887 = vmatpush1.msra.mxu0 %v1867
    %1888 = vmatprep.subr.mxu0 0.0
    %1889 = vmatpush1.msra.mxu0 %v1868
    %1890 = vmatprep.subr.mxu0 0.0
    %1891 = vmatpush1.msra.mxu0 %v1869
    %1892 = vmatprep.subr.mxu0 0.0
    %1893 = vmatpush1.msra.mxu0 %v1870
    %1894 = vmatprep.subr.mxu0 0.0
    %1895 = vmatpush1.msra.mxu0 %v1871
    %1896 = vmatprep.subr.mxu0 0.0
    %1897 = vmatpush1.msra.mxu0 %v1872
    %1898 = vmatprep.subr.mxu0 0.0
    %1899 = vmatpush1.msra.mxu0 %v1873
    %1900 = vmatprep.subr.mxu0 0.0
    %1901 = vmatpush1.msra.mxu0 %v1874
    %1902 = vmatprep.subr.mxu0 0.0
    %1903 = vmatpush1.msra.mxu0 0.0
    %1904 = vmatprep.subr.mxu0 0.0
    %1905 = vmatpush1.msra.mxu0 0.0
    %1906 = vmatprep.subr.mxu0 0.0
    %1907 = vmatpush1.msra.mxu0 0.0
    %1908 = vmatprep.subr.mxu0 0.0
    %1909 = vmatpush1.msra.mxu0 0.0
    %1910 = vmatprep.subr.mxu0 0.0
    %1911 = vmatpush1.msra.mxu0 0.0
    %1912 = vmatprep.subr.mxu0 0.0
    %1913 = vmatpush1.msra.mxu0 0.0
    %1914 = vmatprep.subr.mxu0 0.0
    %1915 = vmatpush1.msra.mxu0 0.0
    %1916 = vmatprep.subr.mxu0 0.0
    %1917 = vmatpush1.msra.mxu0 0.0
    %1918 = vmatprep.subr.mxu0 0.0
    %1919 = vmatpush1.msra.mxu0 0.0
    %1920 = vmatprep.subr.mxu0 0.0
    %1921 = vmatpush1.msra.mxu0 0.0
    %1922 = vmatprep.subr.mxu0 0.0
    %1923 = vmatpush1.msra.mxu0 0.0
    %1924 = vmatprep.subr.mxu0 0.0
    %1925 = vmatpush1.msra.mxu0 0.0
    %1926 = vmatprep.subr.mxu0 0.0
    %1927 = vmatpush1.msra.mxu0 0.0
    %1928 = vmatprep.subr.mxu0 0.0
    %1929 = vmatpush1.msra.mxu0 0.0
    %1930 = vmatprep.subr.mxu0 0.0
    %1931 = vmatpush1.msra.mxu0 0.0
    %1932 = vmatprep.subr.mxu0 0.0
    %1933 = vmatpush1.msra.mxu0 0.0
    %1934 = vmatprep.subr.mxu0 0.0
    %1935 = vmatpush1.msra.mxu0 0.0
    %1936 = vmatprep.subr.mxu0 0.0
    %1937 = vmatpush1.msra.mxu0 0.0
    %1938 = vmatprep.subr.mxu0 0.0
    %1939 = vmatpush1.msra.mxu0 0.0
    %1940 = vmatprep.subr.mxu0 0.0
    %1941 = vmatpush1.msra.mxu0 0.0
    %1942 = vmatprep.subr.mxu0 0.0
    %1943 = vmatpush1.msra.mxu0 0.0
    %1944 = vmatprep.subr.mxu0 0.0
    %1945 = vmatpush1.msra.mxu0 0.0
    %1946 = vmatprep.subr.mxu0 0.0
    %1947 = vmatpush1.msra.mxu0 0.0
    %1948 = vmatprep.subr.mxu0 0.0
    %1949 = vmatpush1.msra.mxu0 0.0
    %1950 = vmatprep.mubr.f32.mxu0 0.0
    %1951 = vmatmul.mubr.f32.gmra.mrb[0].mxu0 %v1881
    %v1952 = vpop.f32.mrb[0].mxu0
    %v1953 = vadd.f32 %v1878, %v1952
    %v1954 = vpop.f32.mrb[0].mxu0
    %1955 = vmatprep.mubr.f32.mxu0 0.0
    %1956 = vmatmul.mubr.f32.gmra.mrb[0].mxu0 %v1884
    %v1957 = vpop.f32.mrb[0].mxu0
    %v1958 = vadd.f32 %v1878, %v1957
    %v1959 = vpop.f32.mrb[0].mxu0
    %1960 = vdwg.mxu0
    %v1961 = vadd.f32 %v1716, %v1953
    %v1962 = vadd.f32 %v1717, %v1958
    %1963 = vst.msk [vmem:[#allocation5] sm:$0xff] %vm51, %v1961
    %1964 = vst.msk [vmem:[#allocation5 + $0x8] sm:$0xff] %vm51, %v1962
    // Predicated region
    $region34: #{tpu_custom_call.1} parent=1 // pred_check
      _
    $region35: #{tpu_custom_call.1} parent=1 // pred_check_branch
      %1966 = sbr.rel (0) target = $region37
    $region36: #{tpu_custom_call.1} parent=1 // pred_region
      %s1968 = ssub.s32 256, 256
      %1969 = vsyncadd [#allocation4], %s1968
      %s1970 = sshll.u32 [#allocation5], 4
      %s1971 = int_to_ptr.vmem [resolvable:$true] %s1970
      %1976 = dma.vmem_to_hbm [thread:$0]  %s1971, 256, %s7, [#allocation4], 128, 128, 8
    $region37: #{tpu_custom_call.1} parent=1 // pred_fallthru
      _
    // Predicated region
    $region38: #{tpu_custom_call.1} parent=1 // pred_check
      _
    $region39: #{tpu_custom_call.1} parent=1 // pred_check_branch
      %1978 = sbr.rel (0) target = $region41
    $region40: #{tpu_custom_call.1} parent=1 // pred_region
      %1979 = dma.done [#allocation4], 256
    $region41: #{tpu_custom_call.1} parent=1 // pred_fallthru
      _
    %1980 = vsyncpa [#allocation3], 1
    %1981 = vsyncpa [#allocation4], 1

</llo_original>
